<compile_context>
chip_gen: v7x
topology: tpu7x:2x2x1
jax: 0.10.0
libtpu: 0.0.40
codegen_flags: <defaults>
</compile_context>

<pallas_src>
import jax
import jax.numpy as jnp
from jax import lax
from jax.experimental import pallas as pl
from jax.experimental.pallas import tpu as pltpu

EPS = 1e-5
LANES = 128


def _round_up(x, m):
    return (x + m - 1) // m * m


# ----------------------------------------------------------------------------
# BlockSpec helpers (grid is always 1-D over the batch axis)
# ----------------------------------------------------------------------------
def _per_image_spec(shape):
    k = len(shape)
    return pl.BlockSpec((1,) + shape, lambda n, _k=k: (n,) + (0,) * _k)


def _full_spec(shape):
    z = (0,) * len(shape)
    return pl.BlockSpec(shape, lambda n, _z=z: _z)


def _vmem_limit_bytes():
    """Generation-aware VMEM limit (~55% of the chip's capacity)."""
    cap = None
    try:
        cap = getattr(pltpu.get_tpu_info(), "vmem_capacity_bytes", None)
    except Exception:
        cap = None
    if not cap:
        cap = 64 * 1024 * 1024  # conservative default (v7x per-TC size)
    return int(cap * 0.55)


# ----------------------------------------------------------------------------
# In-kernel helpers
# ----------------------------------------------------------------------------
def _bn_scale_shift(st_ref, g_ref, b_ref):
    """Fold train-mode BatchNorm (global batch mean/var) into scale/shift."""
    mean = st_ref[0:1, :]
    var = st_ref[1:2, :]
    scale = g_ref[...] * lax.rsqrt(var + EPS)
    shift = b_ref[...] - mean * scale
    return scale, shift


def _combine_stats(st, mi, m):
    """Welford-style combine of per-image (mean, centered-SS) partials."""
    mu_i = st[:, 0, :]                        # (N, Cp)
    ss_i = st[:, 1, :]                        # (N, Cp)
    mean = jnp.mean(mu_i, axis=0)
    var = (jnp.sum(ss_i, axis=0)
           + mi * jnp.sum(jnp.square(mu_i - mean), axis=0)) / m
    return jnp.stack([mean, var], axis=0)     # (2, Cp) f32


# ----------------------------------------------------------------------------
# Pass 1: conv1 (3x3 stride-s) + projection shortcut + partial BN statistics
# ----------------------------------------------------------------------------
def _make_conv1_kernel(stride, Ho, Wo, Cpin, Cpout, has_proj, act_dtype):
    Mi = Ho * Wo
    inv_mi = 1.0 / Mi

    def kernel(*refs):
        if has_proj:
            (x_ref, w1_ref, ws_ref,
             a1_ref, st1_ref, asc_ref, stsc_ref, cols_ref) = refs
        else:
            x_ref, w1_ref, a1_ref, st1_ref, cols_ref = refs

        # im2col assembled as lane-aligned 3-D slices (no per-tap relayout,
        # no 9x HBM replication).
        for dy in range(3):
            for dx in range(3):
                k = dy * 3 + dx
                p, a = dy % stride, dy // stride
                q, b = dx % stride, dx // stride
                cols_ref[:, :, k * Cpin:(k + 1) * Cpin] = (
                    x_ref[0, p, q, a:a + Ho, b:b + Wo, :])

        # One fused MXU matmul, K = 9*Cpin.
        a1 = jnp.dot(cols_ref[...].reshape(Mi, 9 * Cpin), w1_ref[...],
                     preferred_element_type=jnp.float32)
        a1_ref[0] = a1.reshape(Ho, Wo, Cpout).astype(act_dtype)
        mu = jnp.sum(a1, axis=0, keepdims=True) * inv_mi
        st1_ref[0, 0:1, :] = mu
        st1_ref[0, 1:2, :] = jnp.sum(jnp.square(a1 - mu), axis=0,
                                     keepdims=True)

        if has_proj:
            # 1x1 stride-s conv == matmul on the centre tap (tap 4 of cols).
            xc = cols_ref[:, :, 4 * Cpin:5 * Cpin].reshape(Mi, Cpin)
            asc = jnp.dot(xc, ws_ref[...], preferred_element_type=jnp.float32)
            asc_ref[0] = asc.reshape(Ho, Wo, Cpout).astype(act_dtype)
            mus = jnp.sum(asc, axis=0, keepdims=True) * inv_mi
            stsc_ref[0, 0:1, :] = mus
            stsc_ref[0, 1:2, :] = jnp.sum(jnp.square(asc - mus), axis=0,
                                          keepdims=True)

    return kernel


# ----------------------------------------------------------------------------
# Pass 2: BN1 + ReLU + conv2 (3x3 stride-1) + partial BN2 statistics
# ----------------------------------------------------------------------------
def _make_conv2_kernel(Ho, Wo, Cpout, act_dtype):
    Mi = Ho * Wo
    inv_mi = 1.0 / Mi

    def kernel(a1_ref, st1_ref, g1_ref, b1_ref, w2_ref,
               a2_ref, st2_ref, ypad_ref, cols_ref):
        scale, shift = _bn_scale_shift(st1_ref, g1_ref, b1_ref)
        y1 = jnp.maximum(a1_ref[0].astype(jnp.float32)
                         * scale.reshape(1, 1, Cpout)
                         + shift.reshape(1, 1, Cpout), 0.0)

        # Zero only the halo; the interior is fully overwritten every step.
        zrow = jnp.zeros((1, Wo + 2, Cpout), ypad_ref.dtype)
        zcol = jnp.zeros((Ho + 2, 1, Cpout), ypad_ref.dtype)
        ypad_ref[0:1, :, :] = zrow
        ypad_ref[Ho + 1:Ho + 2, :, :] = zrow
        ypad_ref[:, 0:1, :] = zcol
        ypad_ref[:, Wo + 1:Wo + 2, :] = zcol
        ypad_ref[1:1 + Ho, 1:1 + Wo, :] = y1.astype(ypad_ref.dtype)

        # im2col for conv2 via 3-D slices, then one fused K=9*Cpout matmul.
        for dy in range(3):
            for dx in range(3):
                k = dy * 3 + dx
                cols_ref[:, :, k * Cpout:(k + 1) * Cpout] = (
                    ypad_ref[dy:dy + Ho, dx:dx + Wo, :])

        a2 = jnp.dot(cols_ref[...].reshape(Mi, 9 * Cpout), w2_ref[...],
                     preferred_element_type=jnp.float32)
        a2_ref[0] = a2.reshape(Ho, Wo, Cpout).astype(act_dtype)
        mu = jnp.sum(a2, axis=0, keepdims=True) * inv_mi
        st2_ref[0, 0:1, :] = mu
        st2_ref[0, 1:2, :] = jnp.sum(jnp.square(a2 - mu), axis=0,
                                     keepdims=True)

    return kernel


# ----------------------------------------------------------------------------
# Pass 3: BN2 + shortcut-BN + residual add + ReLU
# ----------------------------------------------------------------------------
def _make_fuse_kernel(has_proj, Cpout):
    def kernel(*refs):
        if has_proj:
            (a2_ref, st2_ref, g2_ref, b2_ref,
             asc_ref, stsc_ref, gs_ref, bs_ref, o_ref) = refs
        else:
            a2_ref, st2_ref, g2_ref, b2_ref, x_ref, o_ref = refs

        s2, sh2 = _bn_scale_shift(st2_ref, g2_ref, b2_ref)
        y2 = (a2_ref[0].astype(jnp.float32) * s2.reshape(1, 1, Cpout)
              + sh2.reshape(1, 1, Cpout))

        if has_proj:
            ss, shs = _bn_scale_shift(stsc_ref, gs_ref, bs_ref)
            sc = (asc_ref[0].astype(jnp.float32) * ss.reshape(1, 1, Cpout)
                  + shs.reshape(1, 1, Cpout))
        else:
            sc = x_ref[0]                     # exact f32 identity shortcut

        o_ref[0] = jnp.maximum(y2 + sc, 0.0)

    return kernel


# ----------------------------------------------------------------------------
# Wrapper
# ----------------------------------------------------------------------------
def basic_block_forward(x_nchw, params, stride,
                        mxu_dtype=jnp.bfloat16, act_dtype=jnp.bfloat16):
    """Pallas-TPU forward of the PyTorch BasicBlock (train-mode BatchNorm)."""
    (w1, w2, ws, g1, b1, g2, b2, gs, bs) = params
    N, Cin, H, W = x_nchw.shape
    Cout = w1.shape[-1]
    s = stride
    has_proj = (s != 1) or (Cin != Cout)

    Ho = (H + 2 - 3) // s + 1
    Wo = (W + 2 - 3) // s + 1
    Mi = Ho * Wo
    M = N * Mi
    Hq = Ho + (2 // s)
    Wq = Wo + (2 // s)

    Cpin = _round_up(Cin, LANES)
    Cpout = _round_up(Cout, LANES)

    # ---- layout glue: lane-padded channels, one padded phase-decomposed copy
    x = jnp.transpose(x_nchw, (0, 2, 3, 1)).astype(jnp.float32)       # NHWC
    x = jnp.pad(x, ((0, 0), (0, 0), (0, 0), (0, Cpin - Cin)))
    xp = jnp.pad(x.astype(mxu_dtype),
                 ((0, 0),
                  (1, 1 + s * Hq - (H + 2)),
                  (1, 1 + s * Wq - (W + 2)),
                  (0, 0)))
    # xph[n, p, q, r, c] == xp[n, r*s + p, c*s + q]  (unstrided taps in-kernel)
    xph = xp.reshape(N, Hq, s, Wq, s, Cpin).transpose(0, 2, 4, 1, 3, 5)

    def padw(w, ci, co):
        return jnp.pad(w, ((0, 0), (0, 0), (0, Cpin - ci if w.shape[2] == ci
                                            else Cpout - w.shape[2]),
                           (0, Cpout - co)))

    w1m = jnp.pad(w1, ((0, 0), (0, 0), (0, Cpin - Cin), (0, Cpout - Cout))
                  ).reshape(9 * Cpin, Cpout).astype(mxu_dtype)
    w2m = jnp.pad(w2, ((0, 0), (0, 0), (0, Cpout - Cout), (0, Cpout - Cout))
                  ).reshape(9 * Cpout, Cpout).astype(mxu_dtype)
    wsm = jnp.pad(ws, ((0, 0), (0, 0), (0, Cpin - Cin), (0, Cpout - Cout))
                  ).reshape(Cpin, Cpout).astype(mxu_dtype)

    def rowp(v):
        return jnp.pad(v.astype(jnp.float32),
                       (0, Cpout - Cout)).reshape(1, Cpout)

    im = jnp.dtype(mxu_dtype).itemsize
    ia = jnp.dtype(act_dtype).itemsize
    cparams = pltpu.CompilerParams(
        dimension_semantics=("parallel",),          # both TCs on v7x megacore
        vmem_limit_bytes=_vmem_limit_bytes())

    # ---- pass 1: conv1 (+ projection) + partial BN stats --------------------
    in_specs1 = [_per_image_spec((s, s, Hq, Wq, Cpin)),
                 _full_spec((9 * Cpin, Cpout))]
    inputs1 = [xph, w1m]
    out_shape1 = [jax.ShapeDtypeStruct((N, Ho, Wo, Cpout), act_dtype),
                  jax.ShapeDtypeStruct((N, 2, Cpout), jnp.float32)]
    out_specs1 = [_per_image_spec((Ho, Wo, Cpout)),
                  _per_image_spec((2, Cpout))]
    flops1 = 2 * M * 9 * Cpin * Cpout
    bytes1 = xph.size * im + w1m.size * im + N * Mi * Cpout * ia
    if has_proj:
        in_specs1.append(_full_spec((Cpin, Cpout)))
        inputs1.append(wsm)
        out_shape1 += [jax.ShapeDtypeStruct((N, Ho, Wo, Cpout), act_dtype),
                       jax.ShapeDtypeStruct((N, 2, Cpout), jnp.float32)]
        out_specs1 += [_per_image_spec((Ho, Wo, Cpout)),
                       _per_image_spec((2, Cpout))]
        flops1 += 2 * M * Cpin * Cpout
        bytes1 += wsm.size * im + N * Mi * Cpout * ia

    res1 = pl.pallas_call(
        _make_conv1_kernel(s, Ho, Wo, Cpin, Cpout, has_proj, act_dtype),
        out_shape=tuple(out_shape1),
        grid=(N,),
        in_specs=in_specs1,
        out_specs=tuple(out_specs1),
        scratch_shapes=[pltpu.VMEM((Ho, Wo, 9 * Cpin), mxu_dtype)],
        compiler_params=cparams,
        cost_estimate=pl.CostEstimate(flops=flops1, transcendentals=0,
                                      bytes_accessed=bytes1),
    )(*inputs1)
    if has_proj:
        a1, st1, asc, stsc = res1
        stsc_c = _combine_stats(stsc, Mi, M)
    else:
        a1, st1 = res1
    st1_c = _combine_stats(st1, Mi, M)          # (2, Cpout) global BN1 stats

    # ---- pass 2: BN1 + ReLU + conv2 + partial BN2 stats ----------------------
    flops2 = 2 * M * 9 * Cpout * Cpout + 6 * M * Cpout
    bytes2 = 2 * N * Mi * Cpout * ia + w2m.size * im + N * 2 * Cpout * 4
    a2, st2 = pl.pallas_call(
        _make_conv2_kernel(Ho, Wo, Cpout, act_dtype),
        out_shape=(jax.ShapeDtypeStruct((N, Ho, Wo, Cpout), act_dtype),
                   jax.ShapeDtypeStruct((N, 2, Cpout), jnp.float32)),
        grid=(N,),
        in_specs=[_per_image_spec((Ho, Wo, Cpout)), _full_spec((2, Cpout)),
                  _full_spec((1, Cpout)), _full_spec((1, Cpout)),
                  _full_spec((9 * Cpout, Cpout))],
        out_specs=(_per_image_spec((Ho, Wo, Cpout)),
                   _per_image_spec((2, Cpout))),
        scratch_shapes=[pltpu.VMEM((Ho + 2, Wo + 2, Cpout), mxu_dtype),
                        pltpu.VMEM((Ho, Wo, 9 * Cpout), mxu_dtype)],
        compiler_params=cparams,
        cost_estimate=pl.CostEstimate(flops=flops2, transcendentals=Cpout,
                                      bytes_accessed=bytes2),
    )(a1, st1_c, rowp(g1), rowp(b1), w2m)
    st2_c = _combine_stats(st2, Mi, M)

    # ---- pass 3: BN2 + shortcut BN + residual add + ReLU ---------------------
    in_specs3 = [_per_image_spec((Ho, Wo, Cpout)), _full_spec((2, Cpout)),
                 _full_spec((1, Cpout)), _full_spec((1, Cpout))]
    inputs3 = [a2, st2_c, rowp(g2), rowp(b2)]
    bytes3 = N * Mi * Cpout * (ia + 4)
    if has_proj:
        in_specs3 += [_per_image_spec((Ho, Wo, Cpout)), _full_spec((2, Cpout)),
                      _full_spec((1, Cpout)), _full_spec((1, Cpout))]
        inputs3 += [asc, stsc_c, rowp(gs), rowp(bs)]
        bytes3 += N * Mi * Cpout * ia
    else:
        # Identity shortcut: plain f32 NHWC (Cpin == Cpout, H == Ho here).
        in_specs3.append(_per_image_spec((Ho, Wo, Cpout)))
        inputs3.append(x)
        bytes3 += N * Mi * Cpout * 4

    out = pl.pallas_call(
        _make_fuse_kernel(has_proj, Cpout),
        out_shape=jax.ShapeDtypeStruct((N, Ho, Wo, Cpout), jnp.float32),
        grid=(N,),
        in_specs=in_specs3,
        out_specs=_per_image_spec((Ho, Wo, Cpout)),
        compiler_params=cparams,
        cost_estimate=pl.CostEstimate(flops=8 * M * Cpout,
                                      transcendentals=2 * Cpout,
                                      bytes_accessed=bytes3),
    )(*inputs3)

    out = out[..., :Cout]                        # drop lane-padding channels
    return jnp.transpose(out, (0, 3, 1, 2))      # back to NCHW


# ----------------------------------------------------------------------------
# Pure-JAX reference of the PyTorch BasicBlock forward (train-mode BN)
# ----------------------------------------------------------------------------
def reference_forward(x_nchw, params, stride):
    (w1, w2, ws, g1, b1, g2, b2, gs, bs) = params
    dn = ("NHWC", "HWIO", "NHWC")
    x = jnp.transpose(x_nchw, (0, 2, 3, 1)).astype(jnp.float32)

    def bn_train(y, g, b):
        mean = jnp.mean(y, axis=(0, 1, 2), keepdims=True)
        var = jnp.mean(jnp.square(y - mean), axis=(0, 1, 2), keepdims=True)
        return (y - mean) * lax.rsqrt(var + EPS) * g + b

    y = lax.conv_general_dilated(x, w1, (stride, stride), ((1, 1), (1, 1)),
                                 dimension_numbers=dn)
    y = jnp.maximum(bn_train(y, g1, b1), 0.0)
    y = lax.conv_general_dilated(y, w2, (1, 1), ((1, 1), (1, 1)),
                                 dimension_numbers=dn)
    y = bn_train(y, g2, b2)

    Cin, Cout = x.shape[-1], w1.shape[-1]
    if stride != 1 or Cin != Cout:
        sc = lax.conv_general_dilated(x, ws, (stride, stride),
                                      ((0, 0), (0, 0)), dimension_numbers=dn)
        sc = bn_train(sc, gs, bs)
    else:
        sc = x
    out = jnp.maximum(y + sc, 0.0)
    return jnp.transpose(out, (0, 3, 1, 2))


if __name__ == "__main__":
    key = jax.random.PRNGKey(0)

    def make_params(k, Cin, Cout):
        ks = jax.random.split(k, 9)
        w1 = jax.random.normal(ks[0], (3, 3, Cin, Cout), jnp.float32) * (1.0 / (9 * Cin)) ** 0.5
        w2 = jax.random.normal(ks[1], (3, 3, Cout, Cout), jnp.float32) * (1.0 / (9 * Cout)) ** 0.5
        ws = jax.random.normal(ks[2], (1, 1, Cin, Cout), jnp.float32) * (1.0 / Cin) ** 0.5
        g1 = 1.0 + 0.1 * jax.random.normal(ks[3], (Cout,), jnp.float32)
        b1 = 0.1 * jax.random.normal(ks[4], (Cout,), jnp.float32)
        g2 = 1.0 + 0.1 * jax.random.normal(ks[5], (Cout,), jnp.float32)
        b2 = 0.1 * jax.random.normal(ks[6], (Cout,), jnp.float32)
        gs = 1.0 + 0.1 * jax.random.normal(ks[7], (Cout,), jnp.float32)
        bs = 0.1 * jax.random.normal(ks[8], (Cout,), jnp.float32)
        return (w1, w2, ws, g1, b1, g2, b2, gs, bs)

    def check(N, Cin, Cout, H, W, stride, k):
        kp, kx = jax.random.split(k)
        params = make_params(kp, Cin, Cout)
        x = jax.random.normal(kx, (N, Cin, H, W), jnp.float32)
        ref = jax.block_until_ready(reference_forward(x, params, stride))
        # Exact-semantics check in f32 (tight tolerance).
        out32 = jax.block_until_ready(
            basic_block_forward(x, params, stride,
                                mxu_dtype=jnp.float32, act_dtype=jnp.float32))
        assert out32.shape == ref.shape, (out32.shape, ref.shape)
        err32 = float(jnp.max(jnp.abs(out32 - ref)))
        assert err32 < 5e-4, ("f32 path error", err32)
        # Default fast path: bf16 MXU feed + bf16 inter-pass activations.
        out16 = jax.block_until_ready(basic_block_forward(x, params, stride))
        err16 = float(jnp.max(jnp.abs(out16 - ref)))
        assert err16 < 5e-2, ("bf16 path error", err16)

    k1, k2 = jax.random.split(key)
    # Case 1: downsampling block (stride=2, Cin != Cout -> projection shortcut)
    check(2, 4, 8, 16, 16, 2, k1)
    # Case 2: identity-shortcut block (stride=1, Cin == Cout)
    check(2, 8, 8, 16, 16, 1, k2)

    print("KERNEL_OK")
</pallas_src>

<mosaic_0001>
module attributes {stable_mosaic.version = 11 : i64} {
  func.func @kernel(%arg0: i32, %arg1: memref<1x2x2x9x9x128xf32, #tpu.memory_space<vmem>>, %arg2: memref<1152x128xf32, #tpu.memory_space<vmem>>, %arg3: memref<128x128xf32, #tpu.memory_space<vmem>>, %arg4: memref<1x8x8x128xf32, #tpu.memory_space<vmem>>, %arg5: memref<1x2x128xf32, #tpu.memory_space<vmem>>, %arg6: memref<1x8x8x128xf32, #tpu.memory_space<vmem>>, %arg7: memref<1x2x128xf32, #tpu.memory_space<vmem>>, %arg8: memref<8x8x1152xf32, #tpu.memory_space<vmem>>) attributes {dimension_semantics = [#tpu.dimension_semantics<parallel>], iteration_bounds = array<i64: 2>, scalar_prefetch = 0 : i64, scratch_operands = 1 : i64, tpu.core_type = #tpu.core_type<tc>, window_params = [{transform_indices = @transform_0, window_bounds = array<i64: 1, 2, 2, 9, 9, 128>}, {pipeline_mode = #tpu.pipeline_mode<synchronous>, transform_indices = @transform_1, window_bounds = array<i64: 1152, 128>}, {pipeline_mode = #tpu.pipeline_mode<synchronous>, transform_indices = @transform_2, window_bounds = array<i64: 128, 128>}, {transform_indices = @transform_3, window_bounds = array<i64: 1, 8, 8, 128>}, {transform_indices = @transform_4, window_bounds = array<i64: 1, 2, 128>}, {transform_indices = @transform_5, window_bounds = array<i64: 1, 8, 8, 128>}, {transform_indices = @transform_6, window_bounds = array<i64: 1, 2, 128>}]} {
    %c0 = arith.constant 0 : index
    %c0_0 = arith.constant 0 : index
    %c0_1 = arith.constant 0 : index
    %c0_2 = arith.constant 0 : index
    %c0_3 = arith.constant 0 : index
    %c0_4 = arith.constant 0 : index
    %0 = vector.load %arg1[%c0, %c0_0, %c0_1, %c0_2, %c0_3, %c0_4] : memref<1x2x2x9x9x128xf32, #tpu.memory_space<vmem>>, vector<1x1x1x8x8x128xf32>
    %1 = vector.shape_cast %0 : vector<1x1x1x8x8x128xf32> to vector<8x8x128xf32>
    %c0_5 = arith.constant 0 : index
    %c0_6 = arith.constant 0 : index
    %c0_7 = arith.constant 0 : index
    %2 = vector.load %arg8[%c0_5, %c0_6, %c0_7] : memref<8x8x1152xf32, #tpu.memory_space<vmem>>, vector<8x8x128xf32>
    tpu.vector_store %arg8[%c0_5, %c0_6, %c0_7], %1 {strides = array<i32>} : memref<8x8x1152xf32, #tpu.memory_space<vmem>>, vector<8x8x128xf32>,
    %c0_8 = arith.constant 0 : index
    %c0_9 = arith.constant 0 : index
    %c1 = arith.constant 1 : index
    %c0_10 = arith.constant 0 : index
    %c0_11 = arith.constant 0 : index
    %c0_12 = arith.constant 0 : index
    %3 = vector.load %arg1[%c0_8, %c0_9, %c1, %c0_10, %c0_11, %c0_12] : memref<1x2x2x9x9x128xf32, #tpu.memory_space<vmem>>, vector<1x1x1x8x8x128xf32>
    %4 = vector.shape_cast %3 : vector<1x1x1x8x8x128xf32> to vector<8x8x128xf32>
    %c0_13 = arith.constant 0 : index
    %c0_14 = arith.constant 0 : index
    %c128 = arith.constant 128 : index
    %5 = vector.load %arg8[%c0_13, %c0_14, %c128] : memref<8x8x1152xf32, #tpu.memory_space<vmem>>, vector<8x8x128xf32>
    tpu.vector_store %arg8[%c0_13, %c0_14, %c128], %4 {strides = array<i32>} : memref<8x8x1152xf32, #tpu.memory_space<vmem>>, vector<8x8x128xf32>,
    %c0_15 = arith.constant 0 : index
    %c0_16 = arith.constant 0 : index
    %c0_17 = arith.constant 0 : index
    %c0_18 = arith.constant 0 : index
    %c1_19 = arith.constant 1 : index
    %c0_20 = arith.constant 0 : index
    %6 = vector.load %arg1[%c0_15, %c0_16, %c0_17, %c0_18, %c1_19, %c0_20] : memref<1x2x2x9x9x128xf32, #tpu.memory_space<vmem>>, vector<1x1x1x8x8x128xf32>
    %7 = vector.shape_cast %6 : vector<1x1x1x8x8x128xf32> to vector<8x8x128xf32>
    %c0_21 = arith.constant 0 : index
    %c0_22 = arith.constant 0 : index
    %c256 = arith.constant 256 : index
    %8 = vector.load %arg8[%c0_21, %c0_22, %c256] : memref<8x8x1152xf32, #tpu.memory_space<vmem>>, vector<8x8x128xf32>
    tpu.vector_store %arg8[%c0_21, %c0_22, %c256], %7 {strides = array<i32>} : memref<8x8x1152xf32, #tpu.memory_space<vmem>>, vector<8x8x128xf32>,
    %c0_23 = arith.constant 0 : index
    %c1_24 = arith.constant 1 : index
    %c0_25 = arith.constant 0 : index
    %c0_26 = arith.constant 0 : index
    %c0_27 = arith.constant 0 : index
    %c0_28 = arith.constant 0 : index
    %9 = vector.load %arg1[%c0_23, %c1_24, %c0_25, %c0_26, %c0_27, %c0_28] : memref<1x2x2x9x9x128xf32, #tpu.memory_space<vmem>>, vector<1x1x1x8x8x128xf32>
    %10 = vector.shape_cast %9 : vector<1x1x1x8x8x128xf32> to vector<8x8x128xf32>
    %c0_29 = arith.constant 0 : index
    %c0_30 = arith.constant 0 : index
    %c384 = arith.constant 384 : index
    %11 = vector.load %arg8[%c0_29, %c0_30, %c384] : memref<8x8x1152xf32, #tpu.memory_space<vmem>>, vector<8x8x128xf32>
    tpu.vector_store %arg8[%c0_29, %c0_30, %c384], %10 {strides = array<i32>} : memref<8x8x1152xf32, #tpu.memory_space<vmem>>, vector<8x8x128xf32>,
    %c0_31 = arith.constant 0 : index
    %c1_32 = arith.constant 1 : index
    %c1_33 = arith.constant 1 : index
    %c0_34 = arith.constant 0 : index
    %c0_35 = arith.constant 0 : index
    %c0_36 = arith.constant 0 : index
    %12 = vector.load %arg1[%c0_31, %c1_32, %c1_33, %c0_34, %c0_35, %c0_36] : memref<1x2x2x9x9x128xf32, #tpu.memory_space<vmem>>, vector<1x1x1x8x8x128xf32>
    %13 = vector.shape_cast %12 : vector<1x1x1x8x8x128xf32> to vector<8x8x128xf32>
    %c0_37 = arith.constant 0 : index
    %c0_38 = arith.constant 0 : index
    %c512 = arith.constant 512 : index
    %14 = vector.load %arg8[%c0_37, %c0_38, %c512] : memref<8x8x1152xf32, #tpu.memory_space<vmem>>, vector<8x8x128xf32>
    tpu.vector_store %arg8[%c0_37, %c0_38, %c512], %13 {strides = array<i32>} : memref<8x8x1152xf32, #tpu.memory_space<vmem>>, vector<8x8x128xf32>,
    %c0_39 = arith.constant 0 : index
    %c1_40 = arith.constant 1 : index
    %c0_41 = arith.constant 0 : index
    %c0_42 = arith.constant 0 : index
    %c1_43 = arith.constant 1 : index
    %c0_44 = arith.constant 0 : index
    %15 = vector.load %arg1[%c0_39, %c1_40, %c0_41, %c0_42, %c1_43, %c0_44] : memref<1x2x2x9x9x128xf32, #tpu.memory_space<vmem>>, vector<1x1x1x8x8x128xf32>
    %16 = vector.shape_cast %15 : vector<1x1x1x8x8x128xf32> to vector<8x8x128xf32>
    %c0_45 = arith.constant 0 : index
    %c0_46 = arith.constant 0 : index
    %c640 = arith.constant 640 : index
    %17 = vector.load %arg8[%c0_45, %c0_46, %c640] : memref<8x8x1152xf32, #tpu.memory_space<vmem>>, vector<8x8x128xf32>
    tpu.vector_store %arg8[%c0_45, %c0_46, %c640], %16 {strides = array<i32>} : memref<8x8x1152xf32, #tpu.memory_space<vmem>>, vector<8x8x128xf32>,
    %c0_47 = arith.constant 0 : index
    %c0_48 = arith.constant 0 : index
    %c0_49 = arith.constant 0 : index
    %c1_50 = arith.constant 1 : index
    %c0_51 = arith.constant 0 : index
    %c0_52 = arith.constant 0 : index
    %18 = vector.load %arg1[%c0_47, %c0_48, %c0_49, %c1_50, %c0_51, %c0_52] : memref<1x2x2x9x9x128xf32, #tpu.memory_space<vmem>>, vector<1x1x1x8x8x128xf32>
    %19 = vector.shape_cast %18 : vector<1x1x1x8x8x128xf32> to vector<8x8x128xf32>
    %c0_53 = arith.constant 0 : index
    %c0_54 = arith.constant 0 : index
    %c768 = arith.constant 768 : index
    %20 = vector.load %arg8[%c0_53, %c0_54, %c768] : memref<8x8x1152xf32, #tpu.memory_space<vmem>>, vector<8x8x128xf32>
    tpu.vector_store %arg8[%c0_53, %c0_54, %c768], %19 {strides = array<i32>} : memref<8x8x1152xf32, #tpu.memory_space<vmem>>, vector<8x8x128xf32>,
    %c0_55 = arith.constant 0 : index
    %c0_56 = arith.constant 0 : index
    %c1_57 = arith.constant 1 : index
    %c1_58 = arith.constant 1 : index
    %c0_59 = arith.constant 0 : index
    %c0_60 = arith.constant 0 : index
    %21 = vector.load %arg1[%c0_55, %c0_56, %c1_57, %c1_58, %c0_59, %c0_60] : memref<1x2x2x9x9x128xf32, #tpu.memory_space<vmem>>, vector<1x1x1x8x8x128xf32>
    %22 = vector.shape_cast %21 : vector<1x1x1x8x8x128xf32> to vector<8x8x128xf32>
    %c0_61 = arith.constant 0 : index
    %c0_62 = arith.constant 0 : index
    %c896 = arith.constant 896 : index
    %23 = vector.load %arg8[%c0_61, %c0_62, %c896] : memref<8x8x1152xf32, #tpu.memory_space<vmem>>, vector<8x8x128xf32>
    tpu.vector_store %arg8[%c0_61, %c0_62, %c896], %22 {strides = array<i32>} : memref<8x8x1152xf32, #tpu.memory_space<vmem>>, vector<8x8x128xf32>,
    %c0_63 = arith.constant 0 : index
    %c0_64 = arith.constant 0 : index
    %c0_65 = arith.constant 0 : index
    %c1_66 = arith.constant 1 : index
    %c1_67 = arith.constant 1 : index
    %c0_68 = arith.constant 0 : index
    %24 = vector.load %arg1[%c0_63, %c0_64, %c0_65, %c1_66, %c1_67, %c0_68] : memref<1x2x2x9x9x128xf32, #tpu.memory_space<vmem>>, vector<1x1x1x8x8x128xf32>
    %25 = vector.shape_cast %24 : vector<1x1x1x8x8x128xf32> to vector<8x8x128xf32>
    %c0_69 = arith.constant 0 : index
    %c0_70 = arith.constant 0 : index
    %c1024 = arith.constant 1024 : index
    %26 = vector.load %arg8[%c0_69, %c0_70, %c1024] : memref<8x8x1152xf32, #tpu.memory_space<vmem>>, vector<8x8x128xf32>
    tpu.vector_store %arg8[%c0_69, %c0_70, %c1024], %25 {strides = array<i32>} : memref<8x8x1152xf32, #tpu.memory_space<vmem>>, vector<8x8x128xf32>,
    %c0_71 = arith.constant 0 : index
    %c0_72 = arith.constant 0 : index
    %c0_73 = arith.constant 0 : index
    %27 = vector.load %arg8[%c0_71, %c0_72, %c0_73] : memref<8x8x1152xf32, #tpu.memory_space<vmem>>, vector<8x8x1152xf32>
    %28 = vector.shape_cast %27 : vector<8x8x1152xf32> to vector<64x1152xf32>
    %c0_74 = arith.constant 0 : index
    %c0_75 = arith.constant 0 : index
    %29 = vector.load %arg2[%c0_74, %c0_75] : memref<1152x128xf32, #tpu.memory_space<vmem>>, vector<1152x128xf32>
    %cst = arith.constant dense<0.000000e+00> : vector<64x128xf32>
    %30 = tpu.matmul %28, %29, %cst {dimension_numbers = #tpu.dot_dimension_numbers<[1], [0], [0], [1], [0, 0, 1, 1], [], []>} : vector<64x1152xf32>, vector<1152x128xf32>, vector<64x128xf32> -> vector<64x128xf32>
    %31 = vector.shape_cast %30 : vector<64x128xf32> to vector<8x8x128xf32>
    %c0_76 = arith.constant 0 : index
    %c0_77 = arith.constant 0 : index
    %c0_78 = arith.constant 0 : index
    %c0_79 = arith.constant 0 : index
    %32 = vector.load %arg4[%c0_76, %c0_77, %c0_78, %c0_79] : memref<1x8x8x128xf32, #tpu.memory_space<vmem>>, vector<1x8x8x128xf32>
    %33 = vector.shape_cast %32 : vector<1x8x8x128xf32> to vector<8x8x128xf32>
    %34 = vector.shape_cast %31 : vector<8x8x128xf32> to vector<1x8x8x128xf32>
    tpu.vector_store %arg4[%c0_76, %c0_77, %c0_78, %c0_79], %34 {strides = array<i32>} : memref<1x8x8x128xf32, #tpu.memory_space<vmem>>, vector<1x8x8x128xf32>,
    %cst_80 = arith.constant dense<0.000000e+00> : vector<128xf32>
    %35 = vector.multi_reduction <add>, %30, %cst_80 [0] : vector<64x128xf32> to vector<128xf32>
    %36 = vector.shape_cast %35 : vector<128xf32> to vector<1x128xf32>
    %cst_81 = arith.constant 1.562500e-02 : f32
    %37 = vector.broadcast %cst_81 : f32 to vector<1x128xf32>
    %38 = arith.mulf %36, %37 : vector<1x128xf32>
    %c0_82 = arith.constant 0 : index
    %c0_83 = arith.constant 0 : index
    %c0_84 = arith.constant 0 : index
    %39 = vector.load %arg5[%c0_82, %c0_83, %c0_84] : memref<1x2x128xf32, #tpu.memory_space<vmem>>, vector<1x1x128xf32>
    %40 = vector.shape_cast %39 : vector<1x1x128xf32> to vector<1x128xf32>
    %41 = vector.shape_cast %38 : vector<1x128xf32> to vector<1x1x128xf32>
    tpu.vector_store %arg5[%c0_82, %c0_83, %c0_84], %41 {strides = array<i32>} : memref<1x2x128xf32, #tpu.memory_space<vmem>>, vector<1x1x128xf32>,
    %42 = vector.broadcast %38 : vector<1x128xf32> to vector<64x128xf32>
    %43 = arith.subf %30, %42 : vector<64x128xf32>
    %44 = arith.mulf %43, %43 : vector<64x128xf32>
    %cst_85 = arith.constant dense<0.000000e+00> : vector<128xf32>
    %45 = vector.multi_reduction <add>, %44, %cst_85 [0] : vector<64x128xf32> to vector<128xf32>
    %46 = vector.shape_cast %45 : vector<128xf32> to vector<1x128xf32>
    %c0_86 = arith.constant 0 : index
    %c1_87 = arith.constant 1 : index
    %c0_88 = arith.constant 0 : index
    %47 = vector.load %arg5[%c0_86, %c1_87, %c0_88] : memref<1x2x128xf32, #tpu.memory_space<vmem>>, vector<1x1x128xf32>
    %48 = vector.shape_cast %47 : vector<1x1x128xf32> to vector<1x128xf32>
    %49 = vector.shape_cast %46 : vector<1x128xf32> to vector<1x1x128xf32>
    tpu.vector_store %arg5[%c0_86, %c1_87, %c0_88], %49 {strides = array<i32>} : memref<1x2x128xf32, #tpu.memory_space<vmem>>, vector<1x1x128xf32>,
    %c0_89 = arith.constant 0 : index
    %c0_90 = arith.constant 0 : index
    %c512_91 = arith.constant 512 : index
    %50 = vector.load %arg8[%c0_89, %c0_90, %c512_91] : memref<8x8x1152xf32, #tpu.memory_space<vmem>>, vector<8x8x128xf32>
    %51 = vector.shape_cast %50 : vector<8x8x128xf32> to vector<64x128xf32>
    %c0_92 = arith.constant 0 : index
    %c0_93 = arith.constant 0 : index
    %52 = vector.load %arg3[%c0_92, %c0_93] : memref<128x128xf32, #tpu.memory_space<vmem>>, vector<128x128xf32>
    %cst_94 = arith.constant dense<0.000000e+00> : vector<64x128xf32>
    %53 = tpu.matmul %51, %52, %cst_94 {dimension_numbers = #tpu.dot_dimension_numbers<[1], [0], [0], [1], [0, 0, 1, 1], [], []>} : vector<64x128xf32>, vector<128x128xf32>, vector<64x128xf32> -> vector<64x128xf32>
    %54 = vector.shape_cast %53 : vector<64x128xf32> to vector<8x8x128xf32>
    %c0_95 = arith.constant 0 : index
    %c0_96 = arith.constant 0 : index
    %c0_97 = arith.constant 0 : index
    %c0_98 = arith.constant 0 : index
    %55 = vector.load %arg6[%c0_95, %c0_96, %c0_97, %c0_98] : memref<1x8x8x128xf32, #tpu.memory_space<vmem>>, vector<1x8x8x128xf32>
    %56 = vector.shape_cast %55 : vector<1x8x8x128xf32> to vector<8x8x128xf32>
    %57 = vector.shape_cast %54 : vector<8x8x128xf32> to vector<1x8x8x128xf32>
    tpu.vector_store %arg6[%c0_95, %c0_96, %c0_97, %c0_98], %57 {strides = array<i32>} : memref<1x8x8x128xf32, #tpu.memory_space<vmem>>, vector<1x8x8x128xf32>,
    %cst_99 = arith.constant dense<0.000000e+00> : vector<128xf32>
    %58 = vector.multi_reduction <add>, %53, %cst_99 [0] : vector<64x128xf32> to vector<128xf32>
    %59 = vector.shape_cast %58 : vector<128xf32> to vector<1x128xf32>
    %cst_100 = arith.constant 1.562500e-02 : f32
    %60 = vector.broadcast %cst_100 : f32 to vector<1x128xf32>
    %61 = arith.mulf %59, %60 : vector<1x128xf32>
    %c0_101 = arith.constant 0 : index
    %c0_102 = arith.constant 0 : index
    %c0_103 = arith.constant 0 : index
    %62 = vector.load %arg7[%c0_101, %c0_102, %c0_103] : memref<1x2x128xf32, #tpu.memory_space<vmem>>, vector<1x1x128xf32>
    %63 = vector.shape_cast %62 : vector<1x1x128xf32> to vector<1x128xf32>
    %64 = vector.shape_cast %61 : vector<1x128xf32> to vector<1x1x128xf32>
    tpu.vector_store %arg7[%c0_101, %c0_102, %c0_103], %64 {strides = array<i32>} : memref<1x2x128xf32, #tpu.memory_space<vmem>>, vector<1x1x128xf32>,
    %65 = vector.broadcast %61 : vector<1x128xf32> to vector<64x128xf32>
    %66 = arith.subf %53, %65 : vector<64x128xf32>
    %67 = arith.mulf %66, %66 : vector<64x128xf32>
    %cst_104 = arith.constant dense<0.000000e+00> : vector<128xf32>
    %68 = vector.multi_reduction <add>, %67, %cst_104 [0] : vector<64x128xf32> to vector<128xf32>
    %69 = vector.shape_cast %68 : vector<128xf32> to vector<1x128xf32>
    %c0_105 = arith.constant 0 : index
    %c1_106 = arith.constant 1 : index
    %c0_107 = arith.constant 0 : index
    %70 = vector.load %arg7[%c0_105, %c1_106, %c0_107] : memref<1x2x128xf32, #tpu.memory_space<vmem>>, vector<1x1x128xf32>
    %71 = vector.shape_cast %70 : vector<1x1x128xf32> to vector<1x128xf32>
    %72 = vector.shape_cast %69 : vector<1x128xf32> to vector<1x1x128xf32>
    tpu.vector_store %arg7[%c0_105, %c1_106, %c0_107], %72 {strides = array<i32>} : memref<1x2x128xf32, #tpu.memory_space<vmem>>, vector<1x1x128xf32>,
    return
  }
  func.func @transform_0(%arg0: i32) -> (i32, i32, i32, i32, i32, i32) {
    %c0_i32 = arith.constant 0 : i32
    %c0_i32_0 = arith.constant 0 : i32
    %c0_i32_1 = arith.constant 0 : i32
    %c0_i32_2 = arith.constant 0 : i32
    %c0_i32_3 = arith.constant 0 : i32
    %c0_i32_4 = arith.constant 0 : i32
    return %arg0, %c0_i32, %c0_i32_0, %c0_i32_1, %c0_i32_2, %c0_i32_3 : i32, i32, i32, i32, i32, i32
  }
  func.func @transform_1(%arg0: i32) -> (i32, i32) {
    %c0_i32 = arith.constant 0 : i32
    %c0_i32_0 = arith.constant 0 : i32
    %c0_i32_1 = arith.constant 0 : i32
    return %c0_i32, %c0_i32_0 : i32, i32
  }
  func.func @transform_2(%arg0: i32) -> (i32, i32) {
    %c0_i32 = arith.constant 0 : i32
    %c0_i32_0 = arith.constant 0 : i32
    %c0_i32_1 = arith.constant 0 : i32
    return %c0_i32, %c0_i32_0 : i32, i32
  }
  func.func @transform_3(%arg0: i32) -> (i32, i32, i32, i32) {
    %c0_i32 = arith.constant 0 : i32
    %c0_i32_0 = arith.constant 0 : i32
    %c0_i32_1 = arith.constant 0 : i32
    %c0_i32_2 = arith.constant 0 : i32
    return %arg0, %c0_i32, %c0_i32_0, %c0_i32_1 : i32, i32, i32, i32
  }
  func.func @transform_4(%arg0: i32) -> (i32, i32, i32) {
    %c0_i32 = arith.constant 0 : i32
    %c0_i32_0 = arith.constant 0 : i32
    %c0_i32_1 = arith.constant 0 : i32
    return %arg0, %c0_i32, %c0_i32_0 : i32, i32, i32
  }
  func.func @transform_5(%arg0: i32) -> (i32, i32, i32, i32) {
    %c0_i32 = arith.constant 0 : i32
    %c0_i32_0 = arith.constant 0 : i32
    %c0_i32_1 = arith.constant 0 : i32
    %c0_i32_2 = arith.constant 0 : i32
    return %arg0, %c0_i32, %c0_i32_0, %c0_i32_1 : i32, i32, i32, i32
  }
  func.func @transform_6(%arg0: i32) -> (i32, i32, i32) {
    %c0_i32 = arith.constant 0 : i32
    %c0_i32_0 = arith.constant 0 : i32
    %c0_i32_1 = arith.constant 0 : i32
    return %arg0, %c0_i32, %c0_i32_0 : i32, i32, i32
  }
}

</mosaic_0001>

<llo_original>
// kernel: tpu_custom_call.1
$region0: #{tpu_custom_call.1}
  #allocation0 [shape = 'u32[]', space=smem, size = 0x4, offset = 0x4, fixed_abs, tag = 'smem constant byte address 0x4 - core index']
  #allocation1 [shape = 'u32[144,128]{1,0:T(1,128)}', space=vmem, size = 0x12000, scoped, tag = 'internal scratch']
  #allocation2 [shape = 'f32[8,8,1152]{2,1,0:T(8,128)}', space=vmem, size = 0x48000, scoped, tag = 'scratch operand']
  %s0 = inlined_call_operand.vmem [shape: f32[2,2,2,9,9,128], index: 0, kind: input, shape index: {}]
  %s1 = inlined_call_operand.vmem [shape: f32[1152,128], index: 1, kind: input, shape index: {}]
  %s2 = inlined_call_operand.vmem [shape: f32[128,128], index: 2, kind: input, shape index: {}]
  %s3 = inlined_call_operand.hbm [shape: f32[2,8,8,128], index: 3, kind: output, shape index: {0}]
  %s4 = inlined_call_operand.hbm [shape: f32[2,2,128], index: 4, kind: output, shape index: {1}]
  %s5 = inlined_call_operand.hbm [shape: f32[2,8,8,128], index: 5, kind: output, shape index: {2}]
  %s6 = inlined_call_operand.hbm [shape: f32[2,2,128], index: 6, kind: output, shape index: {3}]
  %7 = xla_tuple %s3, %s4, %s5, %s6
  %s8 = sld [smem:[#allocation0]]
  $region69: #{tpu_custom_call.1} parent=0
    _
  %s10 = ssub.s32 1, %s8
  %s11 = scalar_select 0, %s10, %s8
  $region1: #{tpu_custom_call.1} parent=0
    #allocation3 [shape = 'u8[65536]{0}', space=vmem, size = 0x10000, scoped, tag = 'output window, operand 0']
    #allocation4 [shape = 's32[2]{0}', space=sflag, size = 0x8, scoped, tag = 'scoped memory for tpu_custom_call.1']
    #allocation5 [shape = 'u8[2048]{0}', space=vmem, size = 0x800, scoped, tag = 'output window, operand 1']
    #allocation6 [shape = 's32[2]{0}', space=sflag, size = 0x8, scoped, tag = 'scoped memory for tpu_custom_call.1']
    #allocation7 [shape = 'u8[65536]{0}', space=vmem, size = 0x10000, scoped, tag = 'output window, operand 2']
    #allocation8 [shape = 'u8[2048]{0}', space=vmem, size = 0x800, scoped, tag = 'output window, operand 3']
    #allocation9 [shape = 's32[2]{0}', space=sflag, size = 0x8, scoped, tag = 'scoped memory for tpu_custom_call.1']
    %12 = vsyncpa [#allocation4], 0
    %s13 = scalar_lea.sflag [#allocation4], 1
    %14 = vsyncpa %s13, 0
    %15 = vsyncpa [#allocation6], 0
    %s16 = scalar_lea.sflag [#allocation6], 1
    %17 = vsyncpa %s16, 0
    %18 = vsyncpa [#allocation9], 0
    %s19 = scalar_lea.sflag [#allocation9], 1
    %20 = vsyncpa %s19, 0
    loop: start=0, step=1, limit=4
    $region2: #{tpu_custom_call.1} parent=1 // loop_pre_header
      _
    $region3: #{tpu_custom_call.1} parent=1 // loop_header
      %s22 = sphi 0, %s26
      %p23 = scmp.ge.s32.totalorder %s22, 4
      %s32 = sphi 0, %s34
      %s35 = sphi 0, %s32
      %s36 = sphi 0, %s35
      %s52 = sphi 0, %s36
      %s56 = sphi 0, %s56
      %s58 = sphi 0, %s56
      %s59 = sphi 0, %s58
      %s73 = sphi 0, %s59
      %s77 = sphi 0, %s77
      %s79 = sphi 0, %s77
      %s80 = sphi 0, %s79
      %s94 = sphi 0, %s80
      %s100 = sphi 0, %s102
      %s103 = sphi 0, %s100
      %s104 = sphi 0, %s103
      %s120 = sphi 0, %s104
      %s126 = sphi 0, %s128
      %s129 = sphi 0, %s126
      %s130 = sphi 0, %s129
      %s146 = sphi 0, %s130
      %s152 = sphi 0, %s154
      %s155 = sphi 0, %s152
      %s156 = sphi 0, %s155
      %s172 = sphi 0, %s156
      %s178 = sphi 0, %s180
      %s181 = sphi 0, %s178
      %s182 = sphi 0, %s181
      %s198 = sphi 0, %s182
    $region4: #{tpu_custom_call.1} parent=1 // loop_header_branch
      %25 = sbr.rel (%p23) target = $region8
    $region5: #{tpu_custom_call.1} parent=1 // loop_body
      %s27 = ssub.s32 %s22, 1
      %s28 = ssub.s32 %s22, 2
      %s29 = sadd.s32 %s22, 1
      %s30 = ssub.s32 %s22, %s29
      %p31 = scmp.eq.s32.totalorder %s30, 0
      %s33 = sadd.s32 %s32, 1
      %s34 = scalar_select %p31, %s32, %s33
      %p37 = pneg %p31
      %p38 = scmp.eq.s32.totalorder %s22, 1
      %p39 = por %p37, %p38
      %p40 = scmp.ne.s32.totalorder %s32, %s35
      %p41 = scmp.eq.s32.totalorder %s22, 0
      %p42 = por %p40, %p41
      %p43 = scmp.ne.s32.totalorder %s32, %s35
      %p44 = scmp.eq.s32.totalorder %s27, 1
      %p45 = por %p43, %p44
      %p46 = scmp.ne.s32.totalorder %s35, %s36
      %p47 = scmp.eq.s32.totalorder %s27, 0
      %p48 = por %p46, %p47
      %p49 = scmp.ne.s32.totalorder %s35, %s36
      %p50 = scmp.eq.s32.totalorder %s28, 1
      %p51 = por %p49, %p50
      %p53 = scmp.ne.s32.totalorder %s36, %s52
      %p54 = scmp.eq.s32.totalorder %s28, 0
      %p55 = por %p53, %p54
      %s57 = sadd.s32 %s56, 1
      %p60 = scmp.eq.s32.totalorder %s22, 1
      %p61 = scmp.ne.s32.totalorder %s56, %s58
      %p62 = scmp.eq.s32.totalorder %s22, 0
      %p63 = por %p61, %p62
      %p64 = scmp.ne.s32.totalorder %s56, %s58
      %p65 = scmp.eq.s32.totalorder %s27, 1
      %p66 = por %p64, %p65
      %p67 = scmp.ne.s32.totalorder %s58, %s59
      %p68 = scmp.eq.s32.totalorder %s27, 0
      %p69 = por %p67, %p68
      %p70 = scmp.ne.s32.totalorder %s58, %s59
      %p71 = scmp.eq.s32.totalorder %s28, 1
      %p72 = por %p70, %p71
      %p74 = scmp.ne.s32.totalorder %s59, %s73
      %p75 = scmp.eq.s32.totalorder %s28, 0
      %p76 = por %p74, %p75
      %s78 = sadd.s32 %s77, 1
      %p81 = scmp.eq.s32.totalorder %s22, 1
      %p82 = scmp.ne.s32.totalorder %s77, %s79
      %p83 = scmp.eq.s32.totalorder %s22, 0
      %p84 = por %p82, %p83
      %p85 = scmp.ne.s32.totalorder %s77, %s79
      %p86 = scmp.eq.s32.totalorder %s27, 1
      %p87 = por %p85, %p86
      %p88 = scmp.ne.s32.totalorder %s79, %s80
      %p89 = scmp.eq.s32.totalorder %s27, 0
      %p90 = por %p88, %p89
      %p91 = scmp.ne.s32.totalorder %s79, %s80
      %p92 = scmp.eq.s32.totalorder %s28, 1
      %p93 = por %p91, %p92
      %p95 = scmp.ne.s32.totalorder %s80, %s94
      %p96 = scmp.eq.s32.totalorder %s28, 0
      %p97 = por %p95, %p96
      %s98 = ssub.s32 %s22, %s29
      %p99 = scmp.eq.s32.totalorder %s98, 0
      %s101 = sadd.s32 %s100, 1
      %s102 = scalar_select %p99, %s100, %s101
      %p105 = pneg %p99
      %p106 = scmp.eq.s32.totalorder %s22, 1
      %p107 = por %p105, %p106
      %p108 = scmp.ne.s32.totalorder %s100, %s103
      %p109 = scmp.eq.s32.totalorder %s22, 0
      %p110 = por %p108, %p109
      %p111 = scmp.ne.s32.totalorder %s100, %s103
      %p112 = scmp.eq.s32.totalorder %s27, 1
      %p113 = por %p111, %p112
      %p114 = scmp.ne.s32.totalorder %s103, %s104
      %p115 = scmp.eq.s32.totalorder %s27, 0
      %p116 = por %p114, %p115
      %p117 = scmp.ne.s32.totalorder %s103, %s104
      %p118 = scmp.eq.s32.totalorder %s28, 1
      %p119 = por %p117, %p118
      %p121 = scmp.ne.s32.totalorder %s104, %s120
      %p122 = scmp.eq.s32.totalorder %s28, 0
      %p123 = por %p121, %p122
      %s124 = ssub.s32 %s22, %s29
      %p125 = scmp.eq.s32.totalorder %s124, 0
      %s127 = sadd.s32 %s126, 1
      %s128 = scalar_select %p125, %s126, %s127
      %p131 = pneg %p125
      %p132 = scmp.eq.s32.totalorder %s22, 1
      %p133 = por %p131, %p132
      %p134 = scmp.ne.s32.totalorder %s126, %s129
      %p135 = scmp.eq.s32.totalorder %s22, 0
      %p136 = por %p134, %p135
      %p137 = scmp.ne.s32.totalorder %s126, %s129
      %p138 = scmp.eq.s32.totalorder %s27, 1
      %p139 = por %p137, %p138
      %p140 = scmp.ne.s32.totalorder %s129, %s130
      %p141 = scmp.eq.s32.totalorder %s27, 0
      %p142 = por %p140, %p141
      %p143 = scmp.ne.s32.totalorder %s129, %s130
      %p144 = scmp.eq.s32.totalorder %s28, 1
      %p145 = por %p143, %p144
      %p147 = scmp.ne.s32.totalorder %s130, %s146
      %p148 = scmp.eq.s32.totalorder %s28, 0
      %p149 = por %p147, %p148
      %s150 = ssub.s32 %s22, %s29
      %p151 = scmp.eq.s32.totalorder %s150, 0
      %s153 = sadd.s32 %s152, 1
      %s154 = scalar_select %p151, %s152, %s153
      %p157 = pneg %p151
      %p158 = scmp.eq.s32.totalorder %s22, 1
      %p159 = por %p157, %p158
      %p160 = scmp.ne.s32.totalorder %s152, %s155
      %p161 = scmp.eq.s32.totalorder %s22, 0
      %p162 = por %p160, %p161
      %p163 = scmp.ne.s32.totalorder %s152, %s155
      %p164 = scmp.eq.s32.totalorder %s27, 1
      %p165 = por %p163, %p164
      %p166 = scmp.ne.s32.totalorder %s155, %s156
      %p167 = scmp.eq.s32.totalorder %s27, 0
      %p168 = por %p166, %p167
      %p169 = scmp.ne.s32.totalorder %s155, %s156
      %p170 = scmp.eq.s32.totalorder %s28, 1
      %p171 = por %p169, %p170
      %p173 = scmp.ne.s32.totalorder %s156, %s172
      %p174 = scmp.eq.s32.totalorder %s28, 0
      %p175 = por %p173, %p174
      %s176 = ssub.s32 %s22, %s29
      %p177 = scmp.eq.s32.totalorder %s176, 0
      %s179 = sadd.s32 %s178, 1
      %s180 = scalar_select %p177, %s178, %s179
      %p183 = pneg %p177
      %p184 = scmp.eq.s32.totalorder %s22, 1
      %p185 = por %p183, %p184
      %p186 = scmp.ne.s32.totalorder %s178, %s181
      %p187 = scmp.eq.s32.totalorder %s22, 0
      %p188 = por %p186, %p187
      %p189 = scmp.ne.s32.totalorder %s178, %s181
      %p190 = scmp.eq.s32.totalorder %s27, 1
      %p191 = por %p189, %p190
      %p192 = scmp.ne.s32.totalorder %s181, %s182
      %p193 = scmp.eq.s32.totalorder %s27, 0
      %p194 = por %p192, %p193
      %p195 = scmp.ne.s32.totalorder %s181, %s182
      %p196 = scmp.eq.s32.totalorder %s28, 1
      %p197 = por %p195, %p196
      %p199 = scmp.ne.s32.totalorder %s182, %s198
      %p200 = scmp.eq.s32.totalorder %s28, 0
      %p201 = por %p199, %p200
      %p202 = scmp.le.s32.totalorder 1, %s22
      %p203 = scmp.lt.s32.totalorder %s22, 3
      %p204 = pnand %p202, %p203
      %p205 = pneg %p204
      // Predicated region
      $region9: #{tpu_custom_call.1} parent=5 // pred_check
        _
      $region10: #{tpu_custom_call.1} parent=5 // pred_check_branch
        %207 = sbr.rel (%p204) target = $region12
      $region11: #{tpu_custom_call.1} parent=5 // pred_region
        %s208 = ssub.s32 %s22, 1
        // Predicated region
        $region13: #{tpu_custom_call.1} parent=11 // pred_check
          %p209 = pneg %p69
        $region14: #{tpu_custom_call.1} parent=11 // pred_check_branch
          %211 = sbr.rel (%p209) target = $region16
        $region15: #{tpu_custom_call.1} parent=11 // pred_region
          _
        $region16: #{tpu_custom_call.1} parent=11 // pred_fallthru
          _
        // Predicated region
        $region17: #{tpu_custom_call.1} parent=11 // pred_check
          %p212 = pneg %p90
        $region18: #{tpu_custom_call.1} parent=11 // pred_check_branch
          %214 = sbr.rel (%p212) target = $region20
        $region19: #{tpu_custom_call.1} parent=11 // pred_region
          _
        $region20: #{tpu_custom_call.1} parent=11 // pred_fallthru
          _
      $region12: #{tpu_custom_call.1} parent=5 // pred_fallthru
        _
      %p215 = scmp.lt.s32.totalorder %s22, 2
      // Predicated region
      $region21: #{tpu_custom_call.1} parent=5 // pred_check
        %p216 = pneg %p215
      $region22: #{tpu_custom_call.1} parent=5 // pred_check_branch
        %218 = sbr.rel (%p216) target = $region24
      $region23: #{tpu_custom_call.1} parent=5 // pred_region
        // Predicated region
        $region25: #{tpu_custom_call.1} parent=23 // pred_check
          %p219 = pneg %p42
        $region26: #{tpu_custom_call.1} parent=23 // pred_check_branch
          %221 = sbr.rel (%p219) target = $region28
        $region27: #{tpu_custom_call.1} parent=23 // pred_region
          %p222 = scmp.lt.s32.totalorder %s22, 1
          %s223 = scalar_select %p222, %s22, 1
          %s224 = smul.addr %s223, 72
          %s225 = smul.addr %s224, 8
          %s226 = scalar_lea.vmem %s0, %s225
        $region28: #{tpu_custom_call.1} parent=23 // pred_fallthru
          _
      $region24: #{tpu_custom_call.1} parent=5 // pred_fallthru
        _
      %p227 = scmp.le.s32.totalorder 1, %s22
      %p228 = scmp.lt.s32.totalorder %s22, 3
      %p229 = pnand %p227, %p228
      %p230 = pneg %p229
      // Predicated region
      $region29: #{tpu_custom_call.1} parent=5 // pred_check
        _
      $region30: #{tpu_custom_call.1} parent=5 // pred_check_branch
        %232 = sbr.rel (%p229) target = $region32
      $region31: #{tpu_custom_call.1} parent=5 // pred_region
        %s233 = ssub.s32 %s22, 1
        %p234 = scmp.lt.s32.totalorder %s27, 1
        %s235 = scalar_select %p234, %s27, 1
        %s236 = smul.addr %s235, 72
        %s237 = smul.addr %s236, 8
        %s238 = scalar_lea.vmem %s0, %s237
        %p239 = pneg %p48
        %p240 = pneg %p45
        %p241 = pneg %p69
        %p242 = pneg %p66
        %p243 = pneg %p90
        %p244 = pneg %p87
        %p245 = pneg %p116
        %p246 = pneg %p113
        %s247 = sand.u32 %s103, 1
        %s248 = scalar_lea.sflag [#allocation4], %s247
        %s249 = sand.u32 %s103, 1
        %s250 = smul.addr %s249, 64
        %s251 = scalar_lea.vmem [#allocation3], %s250
        %p252 = pneg %p142
        %p253 = pneg %p139
        %s254 = sand.u32 %s27, 1
        %s255 = scalar_lea.sflag [#allocation6], %s254
        %s256 = sand.u32 %s129, 1
        %s257 = smul.addr %s256, 2
        %s258 = scalar_lea.vmem [#allocation5], %s257
        %p259 = pneg %p168
        %p260 = pneg %p165
        %s261 = sand.u32 %s27, 1
        %s262 = scalar_lea.sflag [#allocation6], %s261
        %s263 = sand.u32 %s155, 1
        %s264 = smul.addr %s263, 64
        %s265 = scalar_lea.vmem [#allocation7], %s264
        %p266 = pneg %p194
        %p267 = pneg %p191
        %s268 = sand.u32 %s181, 1
        %s269 = scalar_lea.sflag [#allocation9], %s268
        %s270 = sand.u32 %s181, 1
        %s271 = smul.addr %s270, 2
        %s272 = scalar_lea.vmem [#allocation8], %s271
        %p273 = scmp.lt.s32.totalorder %s27, 1
        %s274 = scalar_select %p273, %s27, 1
        %s275 = smul.addr %s274, 72
        %s276 = smul.addr %s275, 8
        %s277 = scalar_lea.vmem %s0, %s276
        %v278 = vld [vmem:[%s277] sm:$0xff]
        %v279 = vld [vmem:[%s277 + $0x10] sm:$0xff]
        %v280 = vld [vmem:[%s277 + $0x20] sm:$0xff]
        %v281 = vld [vmem:[%s277 + $0x30] sm:$0xff]
        %v282 = vld [vmem:[%s277 + $0x40] sm:$0xff]
        %v283 = vld [vmem:[%s277 + $0x50] sm:$0xff]
        %v284 = vld [vmem:[%s277 + $0x60] sm:$0xff]
        %v285 = vld [vmem:[%s277 + $0x70] sm:$0xff]
        %286 = vst [vmem:[#allocation2] sm:$0xff] %v278
        %287 = vst [vmem:[#allocation2 + $0x48] sm:$0xff] %v279
        %288 = vst [vmem:[#allocation2 + $0x90] sm:$0xff] %v280
        %289 = vst [vmem:[#allocation2 + $0xd8] sm:$0xff] %v281
        %290 = vst [vmem:[#allocation2 + $0x120] sm:$0xff] %v282
        %291 = vst [vmem:[#allocation2 + $0x168] sm:$0xff] %v283
        %292 = vst [vmem:[#allocation2 + $0x1b0] sm:$0xff] %v284
        %293 = vst [vmem:[#allocation2 + $0x1f8] sm:$0xff] %v285
        %s294 = scalar_lea.vmem %s277, 144
        %v295 = vld [vmem:[%s294] sm:$0xff]
        %v296 = vld [vmem:[%s294 + $0x10] sm:$0xff]
        %v297 = vld [vmem:[%s294 + $0x20] sm:$0xff]
        %v298 = vld [vmem:[%s294 + $0x30] sm:$0xff]
        %v299 = vld [vmem:[%s294 + $0x40] sm:$0xff]
        %v300 = vld [vmem:[%s294 + $0x50] sm:$0xff]
        %v301 = vld [vmem:[%s294 + $0x60] sm:$0xff]
        %v302 = vld [vmem:[%s294 + $0x70] sm:$0xff]
        %303 = vst [vmem:[#allocation2 + $0x8] sm:$0xff] %v295
        %304 = vst [vmem:[#allocation2 + $0x50] sm:$0xff] %v296
        %305 = vst [vmem:[#allocation2 + $0x98] sm:$0xff] %v297
        %306 = vst [vmem:[#allocation2 + $0xe0] sm:$0xff] %v298
        %307 = vst [vmem:[#allocation2 + $0x128] sm:$0xff] %v299
        %308 = vst [vmem:[#allocation2 + $0x170] sm:$0xff] %v300
        %309 = vst [vmem:[#allocation2 + $0x1b8] sm:$0xff] %v301
        %310 = vst [vmem:[#allocation2 + $0x200] sm:$0xff] %v302
        %v311 = vld [vmem:[%s277 + $0x1] sm:$0xff]
        %v312 = vld [vmem:[%s277 + $0x11] sm:$0xff]
        %v313 = vld [vmem:[%s277 + $0x21] sm:$0xff]
        %v314 = vld [vmem:[%s277 + $0x31] sm:$0xff]
        %v315 = vld [vmem:[%s277 + $0x41] sm:$0xff]
        %v316 = vld [vmem:[%s277 + $0x51] sm:$0xff]
        %v317 = vld [vmem:[%s277 + $0x61] sm:$0xff]
        %v318 = vld [vmem:[%s277 + $0x71] sm:$0xff]
        %319 = vst [vmem:[#allocation2 + $0x10] sm:$0xff] %v311
        %320 = vst [vmem:[#allocation2 + $0x58] sm:$0xff] %v312
        %321 = vst [vmem:[#allocation2 + $0xa0] sm:$0xff] %v313
        %322 = vst [vmem:[#allocation2 + $0xe8] sm:$0xff] %v314
        %323 = vst [vmem:[#allocation2 + $0x130] sm:$0xff] %v315
        %324 = vst [vmem:[#allocation2 + $0x178] sm:$0xff] %v316
        %325 = vst [vmem:[#allocation2 + $0x1c0] sm:$0xff] %v317
        %326 = vst [vmem:[#allocation2 + $0x208] sm:$0xff] %v318
        %s327 = scalar_lea.vmem %s277, 288
        %v328 = vld [vmem:[%s327] sm:$0xff]
        %v329 = vld [vmem:[%s327 + $0x10] sm:$0xff]
        %v330 = vld [vmem:[%s327 + $0x20] sm:$0xff]
        %v331 = vld [vmem:[%s327 + $0x30] sm:$0xff]
        %v332 = vld [vmem:[%s327 + $0x40] sm:$0xff]
        %v333 = vld [vmem:[%s327 + $0x50] sm:$0xff]
        %v334 = vld [vmem:[%s327 + $0x60] sm:$0xff]
        %v335 = vld [vmem:[%s327 + $0x70] sm:$0xff]
        %336 = vst [vmem:[#allocation2 + $0x18] sm:$0xff] %v328
        %337 = vst [vmem:[#allocation2 + $0x60] sm:$0xff] %v329
        %338 = vst [vmem:[#allocation2 + $0xa8] sm:$0xff] %v330
        %339 = vst [vmem:[#allocation2 + $0xf0] sm:$0xff] %v331
        %340 = vst [vmem:[#allocation2 + $0x138] sm:$0xff] %v332
        %341 = vst [vmem:[#allocation2 + $0x180] sm:$0xff] %v333
        %342 = vst [vmem:[#allocation2 + $0x1c8] sm:$0xff] %v334
        %343 = vst [vmem:[#allocation2 + $0x210] sm:$0xff] %v335
        %s344 = scalar_lea.vmem %s277, 432
        %v345 = vld [vmem:[%s344] sm:$0xff]
        %v346 = vld [vmem:[%s344 + $0x10] sm:$0xff]
        %v347 = vld [vmem:[%s344 + $0x20] sm:$0xff]
        %v348 = vld [vmem:[%s344 + $0x30] sm:$0xff]
        %v349 = vld [vmem:[%s344 + $0x40] sm:$0xff]
        %v350 = vld [vmem:[%s344 + $0x50] sm:$0xff]
        %v351 = vld [vmem:[%s344 + $0x60] sm:$0xff]
        %v352 = vld [vmem:[%s344 + $0x70] sm:$0xff]
        %353 = vst [vmem:[#allocation2 + $0x20] sm:$0xff] %v345
        %354 = vst [vmem:[#allocation2 + $0x68] sm:$0xff] %v346
        %355 = vst [vmem:[#allocation2 + $0xb0] sm:$0xff] %v347
        %356 = vst [vmem:[#allocation2 + $0xf8] sm:$0xff] %v348
        %357 = vst [vmem:[#allocation2 + $0x140] sm:$0xff] %v349
        %358 = vst [vmem:[#allocation2 + $0x188] sm:$0xff] %v350
        %359 = vst [vmem:[#allocation2 + $0x1d0] sm:$0xff] %v351
        %360 = vst [vmem:[#allocation2 + $0x218] sm:$0xff] %v352
        %v361 = vld [vmem:[%s327 + $0x1] sm:$0xff]
        %v362 = vld [vmem:[%s327 + $0x11] sm:$0xff]
        %v363 = vld [vmem:[%s327 + $0x21] sm:$0xff]
        %v364 = vld [vmem:[%s327 + $0x31] sm:$0xff]
        %v365 = vld [vmem:[%s327 + $0x41] sm:$0xff]
        %v366 = vld [vmem:[%s327 + $0x51] sm:$0xff]
        %v367 = vld [vmem:[%s327 + $0x61] sm:$0xff]
        %v368 = vld [vmem:[%s327 + $0x71] sm:$0xff]
        %369 = vst [vmem:[#allocation2 + $0x28] sm:$0xff] %v361
        %370 = vst [vmem:[#allocation2 + $0x70] sm:$0xff] %v362
        %371 = vst [vmem:[#allocation2 + $0xb8] sm:$0xff] %v363
        %372 = vst [vmem:[#allocation2 + $0x100] sm:$0xff] %v364
        %373 = vst [vmem:[#allocation2 + $0x148] sm:$0xff] %v365
        %374 = vst [vmem:[#allocation2 + $0x190] sm:$0xff] %v366
        %375 = vst [vmem:[#allocation2 + $0x1d8] sm:$0xff] %v367
        %376 = vst [vmem:[#allocation2 + $0x220] sm:$0xff] %v368
        %s377 = scalar_lea.vmem %s277, 16
        %v378 = vld [vmem:[%s377] sm:$0xff]
        %v379 = vld [vmem:[%s377 + $0x10] sm:$0xff]
        %v380 = vld [vmem:[%s377 + $0x20] sm:$0xff]
        %v381 = vld [vmem:[%s377 + $0x30] sm:$0xff]
        %v382 = vld [vmem:[%s377 + $0x40] sm:$0xff]
        %v383 = vld [vmem:[%s377 + $0x50] sm:$0xff]
        %v384 = vld [vmem:[%s377 + $0x60] sm:$0xff]
        %v385 = vld [vmem:[%s377 + $0x70] sm:$0xff]
        %386 = vst [vmem:[#allocation2 + $0x30] sm:$0xff] %v378
        %387 = vst [vmem:[#allocation2 + $0x78] sm:$0xff] %v379
        %388 = vst [vmem:[#allocation2 + $0xc0] sm:$0xff] %v380
        %389 = vst [vmem:[#allocation2 + $0x108] sm:$0xff] %v381
        %390 = vst [vmem:[#allocation2 + $0x150] sm:$0xff] %v382
        %391 = vst [vmem:[#allocation2 + $0x198] sm:$0xff] %v383
        %392 = vst [vmem:[#allocation2 + $0x1e0] sm:$0xff] %v384
        %393 = vst [vmem:[#allocation2 + $0x228] sm:$0xff] %v385
        %s394 = scalar_lea.vmem %s277, 160
        %v395 = vld [vmem:[%s394] sm:$0xff]
        %v396 = vld [vmem:[%s394 + $0x10] sm:$0xff]
        %v397 = vld [vmem:[%s394 + $0x20] sm:$0xff]
        %v398 = vld [vmem:[%s394 + $0x30] sm:$0xff]
        %v399 = vld [vmem:[%s394 + $0x40] sm:$0xff]
        %v400 = vld [vmem:[%s394 + $0x50] sm:$0xff]
        %v401 = vld [vmem:[%s394 + $0x60] sm:$0xff]
        %v402 = vld [vmem:[%s394 + $0x70] sm:$0xff]
        %403 = vst [vmem:[#allocation2 + $0x38] sm:$0xff] %v395
        %404 = vst [vmem:[#allocation2 + $0x80] sm:$0xff] %v396
        %405 = vst [vmem:[#allocation2 + $0xc8] sm:$0xff] %v397
        %406 = vst [vmem:[#allocation2 + $0x110] sm:$0xff] %v398
        %407 = vst [vmem:[#allocation2 + $0x158] sm:$0xff] %v399
        %408 = vst [vmem:[#allocation2 + $0x1a0] sm:$0xff] %v400
        %409 = vst [vmem:[#allocation2 + $0x1e8] sm:$0xff] %v401
        %410 = vst [vmem:[#allocation2 + $0x230] sm:$0xff] %v402
        %v411 = vld [vmem:[%s377 + $0x1] sm:$0xff]
        %v412 = vld [vmem:[%s377 + $0x11] sm:$0xff]
        %v413 = vld [vmem:[%s377 + $0x21] sm:$0xff]
        %v414 = vld [vmem:[%s377 + $0x31] sm:$0xff]
        %v415 = vld [vmem:[%s377 + $0x41] sm:$0xff]
        %v416 = vld [vmem:[%s377 + $0x51] sm:$0xff]
        %v417 = vld [vmem:[%s377 + $0x61] sm:$0xff]
        %v418 = vld [vmem:[%s377 + $0x71] sm:$0xff]
        %419 = vst [vmem:[#allocation2 + $0x40] sm:$0xff] %v411
        %420 = vst [vmem:[#allocation2 + $0x88] sm:$0xff] %v412
        %421 = vst [vmem:[#allocation2 + $0xd0] sm:$0xff] %v413
        %422 = vst [vmem:[#allocation2 + $0x118] sm:$0xff] %v414
        %423 = vst [vmem:[#allocation2 + $0x160] sm:$0xff] %v415
        %424 = vst [vmem:[#allocation2 + $0x1a8] sm:$0xff] %v416
        %425 = vst [vmem:[#allocation2 + $0x1f0] sm:$0xff] %v417
        %426 = vst [vmem:[#allocation2 + $0x238] sm:$0xff] %v418
        %v427 = vld [vmem:[#allocation2] sm:$0xff]
        %v428 = vld [vmem:[#allocation2 + $0x8] sm:$0xff]
        %v429 = vld [vmem:[#allocation2 + $0x10] sm:$0xff]
        %v430 = vld [vmem:[#allocation2 + $0x18] sm:$0xff]
        %v431 = vld [vmem:[#allocation2 + $0x20] sm:$0xff]
        %v432 = vld [vmem:[#allocation2 + $0x28] sm:$0xff]
        %v433 = vld [vmem:[#allocation2 + $0x30] sm:$0xff]
        %v434 = vld [vmem:[#allocation2 + $0x38] sm:$0xff]
        %v435 = vld [vmem:[#allocation2 + $0x40] sm:$0xff]
        %v436 = vld [vmem:[#allocation2 + $0x48] sm:$0xff]
        %v437 = vld [vmem:[#allocation2 + $0x50] sm:$0xff]
        %v438 = vld [vmem:[#allocation2 + $0x58] sm:$0xff]
        %v439 = vld [vmem:[#allocation2 + $0x60] sm:$0xff]
        %v440 = vld [vmem:[#allocation2 + $0x68] sm:$0xff]
        %v441 = vld [vmem:[#allocation2 + $0x70] sm:$0xff]
        %v442 = vld [vmem:[#allocation2 + $0x78] sm:$0xff]
        %v443 = vld [vmem:[#allocation2 + $0x80] sm:$0xff]
        %v444 = vld [vmem:[#allocation2 + $0x88] sm:$0xff]
        %v445 = vld [vmem:[#allocation2 + $0x90] sm:$0xff]
        %v446 = vld [vmem:[#allocation2 + $0x98] sm:$0xff]
        %v447 = vld [vmem:[#allocation2 + $0xa0] sm:$0xff]
        %v448 = vld [vmem:[#allocation2 + $0xa8] sm:$0xff]
        %v449 = vld [vmem:[#allocation2 + $0xb0] sm:$0xff]
        %v450 = vld [vmem:[#allocation2 + $0xb8] sm:$0xff]
        %v451 = vld [vmem:[#allocation2 + $0xc0] sm:$0xff]
        %v452 = vld [vmem:[#allocation2 + $0xc8] sm:$0xff]
        %v453 = vld [vmem:[#allocation2 + $0xd0] sm:$0xff]
        %v454 = vld [vmem:[#allocation2 + $0xd8] sm:$0xff]
        %v455 = vld [vmem:[#allocation2 + $0xe0] sm:$0xff]
        %v456 = vld [vmem:[#allocation2 + $0xe8] sm:$0xff]
        %v457 = vld [vmem:[#allocation2 + $0xf0] sm:$0xff]
        %v458 = vld [vmem:[#allocation2 + $0xf8] sm:$0xff]
        %v459 = vld [vmem:[#allocation2 + $0x100] sm:$0xff]
        %v460 = vld [vmem:[#allocation2 + $0x108] sm:$0xff]
        %v461 = vld [vmem:[#allocation2 + $0x110] sm:$0xff]
        %v462 = vld [vmem:[#allocation2 + $0x118] sm:$0xff]
        %v463 = vld [vmem:[#allocation2 + $0x120] sm:$0xff]
        %v464 = vld [vmem:[#allocation2 + $0x128] sm:$0xff]
        %v465 = vld [vmem:[#allocation2 + $0x130] sm:$0xff]
        %v466 = vld [vmem:[#allocation2 + $0x138] sm:$0xff]
        %v467 = vld [vmem:[#allocation2 + $0x140] sm:$0xff]
        %v468 = vld [vmem:[#allocation2 + $0x148] sm:$0xff]
        %v469 = vld [vmem:[#allocation2 + $0x150] sm:$0xff]
        %v470 = vld [vmem:[#allocation2 + $0x158] sm:$0xff]
        %v471 = vld [vmem:[#allocation2 + $0x160] sm:$0xff]
        %v472 = vld [vmem:[#allocation2 + $0x168] sm:$0xff]
        %v473 = vld [vmem:[#allocation2 + $0x170] sm:$0xff]
        %v474 = vld [vmem:[#allocation2 + $0x178] sm:$0xff]
        %v475 = vld [vmem:[#allocation2 + $0x180] sm:$0xff]
        %v476 = vld [vmem:[#allocation2 + $0x188] sm:$0xff]
        %v477 = vld [vmem:[#allocation2 + $0x190] sm:$0xff]
        %v478 = vld [vmem:[#allocation2 + $0x198] sm:$0xff]
        %v479 = vld [vmem:[#allocation2 + $0x1a0] sm:$0xff]
        %v480 = vld [vmem:[#allocation2 + $0x1a8] sm:$0xff]
        %v481 = vld [vmem:[#allocation2 + $0x1b0] sm:$0xff]
        %v482 = vld [vmem:[#allocation2 + $0x1b8] sm:$0xff]
        %v483 = vld [vmem:[#allocation2 + $0x1c0] sm:$0xff]
        %v484 = vld [vmem:[#allocation2 + $0x1c8] sm:$0xff]
        %v485 = vld [vmem:[#allocation2 + $0x1d0] sm:$0xff]
        %v486 = vld [vmem:[#allocation2 + $0x1d8] sm:$0xff]
        %v487 = vld [vmem:[#allocation2 + $0x1e0] sm:$0xff]
        %v488 = vld [vmem:[#allocation2 + $0x1e8] sm:$0xff]
        %v489 = vld [vmem:[#allocation2 + $0x1f0] sm:$0xff]
        %v490 = vld [vmem:[#allocation2 + $0x1f8] sm:$0xff]
        %v491 = vld [vmem:[#allocation2 + $0x200] sm:$0xff]
        %v492 = vld [vmem:[#allocation2 + $0x208] sm:$0xff]
        %v493 = vld [vmem:[#allocation2 + $0x210] sm:$0xff]
        %v494 = vld [vmem:[#allocation2 + $0x218] sm:$0xff]
        %v495 = vld [vmem:[#allocation2 + $0x220] sm:$0xff]
        %v496 = vld [vmem:[#allocation2 + $0x228] sm:$0xff]
        %v497 = vld [vmem:[#allocation2 + $0x230] sm:$0xff]
        %v498 = vld [vmem:[#allocation2 + $0x238] sm:$0xff]
        %v499 = vld [vmem:[%s1] sm:$0xff]
        %v500 = vld [vmem:[%s1 + $0x8] sm:$0xff]
        %v501 = vld [vmem:[%s1 + $0x10] sm:$0xff]
        %v502 = vld [vmem:[%s1 + $0x18] sm:$0xff]
        %v503 = vld [vmem:[%s1 + $0x20] sm:$0xff]
        %v504 = vld [vmem:[%s1 + $0x28] sm:$0xff]
        %v505 = vld [vmem:[%s1 + $0x30] sm:$0xff]
        %v506 = vld [vmem:[%s1 + $0x38] sm:$0xff]
        %v507 = vld [vmem:[%s1 + $0x40] sm:$0xff]
        %v508 = vld [vmem:[%s1 + $0x48] sm:$0xff]
        %v509 = vld [vmem:[%s1 + $0x50] sm:$0xff]
        %v510 = vld [vmem:[%s1 + $0x58] sm:$0xff]
        %v511 = vld [vmem:[%s1 + $0x60] sm:$0xff]
        %v512 = vld [vmem:[%s1 + $0x68] sm:$0xff]
        %v513 = vld [vmem:[%s1 + $0x70] sm:$0xff]
        %v514 = vld [vmem:[%s1 + $0x78] sm:$0xff]
        %v515 = vld [vmem:[%s1 + $0x80] sm:$0xff]
        %v516 = vld [vmem:[%s1 + $0x88] sm:$0xff]
        %v517 = vld [vmem:[%s1 + $0x90] sm:$0xff]
        %v518 = vld [vmem:[%s1 + $0x98] sm:$0xff]
        %v519 = vld [vmem:[%s1 + $0xa0] sm:$0xff]
        %v520 = vld [vmem:[%s1 + $0xa8] sm:$0xff]
        %v521 = vld [vmem:[%s1 + $0xb0] sm:$0xff]
        %v522 = vld [vmem:[%s1 + $0xb8] sm:$0xff]
        %v523 = vld [vmem:[%s1 + $0xc0] sm:$0xff]
        %v524 = vld [vmem:[%s1 + $0xc8] sm:$0xff]
        %v525 = vld [vmem:[%s1 + $0xd0] sm:$0xff]
        %v526 = vld [vmem:[%s1 + $0xd8] sm:$0xff]
        %v527 = vld [vmem:[%s1 + $0xe0] sm:$0xff]
        %v528 = vld [vmem:[%s1 + $0xe8] sm:$0xff]
        %v529 = vld [vmem:[%s1 + $0xf0] sm:$0xff]
        %v530 = vld [vmem:[%s1 + $0xf8] sm:$0xff]
        %v531 = vld [vmem:[%s1 + $0x100] sm:$0xff]
        %v532 = vld [vmem:[%s1 + $0x108] sm:$0xff]
        %v533 = vld [vmem:[%s1 + $0x110] sm:$0xff]
        %v534 = vld [vmem:[%s1 + $0x118] sm:$0xff]
        %v535 = vld [vmem:[%s1 + $0x120] sm:$0xff]
        %v536 = vld [vmem:[%s1 + $0x128] sm:$0xff]
        %v537 = vld [vmem:[%s1 + $0x130] sm:$0xff]
        %v538 = vld [vmem:[%s1 + $0x138] sm:$0xff]
        %v539 = vld [vmem:[%s1 + $0x140] sm:$0xff]
        %v540 = vld [vmem:[%s1 + $0x148] sm:$0xff]
        %v541 = vld [vmem:[%s1 + $0x150] sm:$0xff]
        %v542 = vld [vmem:[%s1 + $0x158] sm:$0xff]
        %v543 = vld [vmem:[%s1 + $0x160] sm:$0xff]
        %v544 = vld [vmem:[%s1 + $0x168] sm:$0xff]
        %v545 = vld [vmem:[%s1 + $0x170] sm:$0xff]
        %v546 = vld [vmem:[%s1 + $0x178] sm:$0xff]
        %v547 = vld [vmem:[%s1 + $0x180] sm:$0xff]
        %v548 = vld [vmem:[%s1 + $0x188] sm:$0xff]
        %v549 = vld [vmem:[%s1 + $0x190] sm:$0xff]
        %v550 = vld [vmem:[%s1 + $0x198] sm:$0xff]
        %v551 = vld [vmem:[%s1 + $0x1a0] sm:$0xff]
        %v552 = vld [vmem:[%s1 + $0x1a8] sm:$0xff]
        %v553 = vld [vmem:[%s1 + $0x1b0] sm:$0xff]
        %v554 = vld [vmem:[%s1 + $0x1b8] sm:$0xff]
        %v555 = vld [vmem:[%s1 + $0x1c0] sm:$0xff]
        %v556 = vld [vmem:[%s1 + $0x1c8] sm:$0xff]
        %v557 = vld [vmem:[%s1 + $0x1d0] sm:$0xff]
        %v558 = vld [vmem:[%s1 + $0x1d8] sm:$0xff]
        %v559 = vld [vmem:[%s1 + $0x1e0] sm:$0xff]
        %v560 = vld [vmem:[%s1 + $0x1e8] sm:$0xff]
        %v561 = vld [vmem:[%s1 + $0x1f0] sm:$0xff]
        %v562 = vld [vmem:[%s1 + $0x1f8] sm:$0xff]
        %v563 = vld [vmem:[%s1 + $0x200] sm:$0xff]
        %v564 = vld [vmem:[%s1 + $0x208] sm:$0xff]
        %v565 = vld [vmem:[%s1 + $0x210] sm:$0xff]
        %v566 = vld [vmem:[%s1 + $0x218] sm:$0xff]
        %v567 = vld [vmem:[%s1 + $0x220] sm:$0xff]
        %v568 = vld [vmem:[%s1 + $0x228] sm:$0xff]
        %v569 = vld [vmem:[%s1 + $0x230] sm:$0xff]
        %v570 = vld [vmem:[%s1 + $0x238] sm:$0xff]
        %v571 = vld [vmem:[%s1 + $0x240] sm:$0xff]
        %v572 = vld [vmem:[%s1 + $0x248] sm:$0xff]
        %v573 = vld [vmem:[%s1 + $0x250] sm:$0xff]
        %v574 = vld [vmem:[%s1 + $0x258] sm:$0xff]
        %v575 = vld [vmem:[%s1 + $0x260] sm:$0xff]
        %v576 = vld [vmem:[%s1 + $0x268] sm:$0xff]
        %v577 = vld [vmem:[%s1 + $0x270] sm:$0xff]
        %v578 = vld [vmem:[%s1 + $0x278] sm:$0xff]
        %v579 = vld [vmem:[%s1 + $0x280] sm:$0xff]
        %v580 = vld [vmem:[%s1 + $0x288] sm:$0xff]
        %v581 = vld [vmem:[%s1 + $0x290] sm:$0xff]
        %v582 = vld [vmem:[%s1 + $0x298] sm:$0xff]
        %v583 = vld [vmem:[%s1 + $0x2a0] sm:$0xff]
        %v584 = vld [vmem:[%s1 + $0x2a8] sm:$0xff]
        %v585 = vld [vmem:[%s1 + $0x2b0] sm:$0xff]
        %v586 = vld [vmem:[%s1 + $0x2b8] sm:$0xff]
        %v587 = vld [vmem:[%s1 + $0x2c0] sm:$0xff]
        %v588 = vld [vmem:[%s1 + $0x2c8] sm:$0xff]
        %v589 = vld [vmem:[%s1 + $0x2d0] sm:$0xff]
        %v590 = vld [vmem:[%s1 + $0x2d8] sm:$0xff]
        %v591 = vld [vmem:[%s1 + $0x2e0] sm:$0xff]
        %v592 = vld [vmem:[%s1 + $0x2e8] sm:$0xff]
        %v593 = vld [vmem:[%s1 + $0x2f0] sm:$0xff]
        %v594 = vld [vmem:[%s1 + $0x2f8] sm:$0xff]
        %v595 = vld [vmem:[%s1 + $0x300] sm:$0xff]
        %v596 = vld [vmem:[%s1 + $0x308] sm:$0xff]
        %v597 = vld [vmem:[%s1 + $0x310] sm:$0xff]
        %v598 = vld [vmem:[%s1 + $0x318] sm:$0xff]
        %v599 = vld [vmem:[%s1 + $0x320] sm:$0xff]
        %v600 = vld [vmem:[%s1 + $0x328] sm:$0xff]
        %v601 = vld [vmem:[%s1 + $0x330] sm:$0xff]
        %v602 = vld [vmem:[%s1 + $0x338] sm:$0xff]
        %v603 = vld [vmem:[%s1 + $0x340] sm:$0xff]
        %v604 = vld [vmem:[%s1 + $0x348] sm:$0xff]
        %v605 = vld [vmem:[%s1 + $0x350] sm:$0xff]
        %v606 = vld [vmem:[%s1 + $0x358] sm:$0xff]
        %v607 = vld [vmem:[%s1 + $0x360] sm:$0xff]
        %v608 = vld [vmem:[%s1 + $0x368] sm:$0xff]
        %v609 = vld [vmem:[%s1 + $0x370] sm:$0xff]
        %v610 = vld [vmem:[%s1 + $0x378] sm:$0xff]
        %v611 = vld [vmem:[%s1 + $0x380] sm:$0xff]
        %v612 = vld [vmem:[%s1 + $0x388] sm:$0xff]
        %v613 = vld [vmem:[%s1 + $0x390] sm:$0xff]
        %v614 = vld [vmem:[%s1 + $0x398] sm:$0xff]
        %v615 = vld [vmem:[%s1 + $0x3a0] sm:$0xff]
        %v616 = vld [vmem:[%s1 + $0x3a8] sm:$0xff]
        %v617 = vld [vmem:[%s1 + $0x3b0] sm:$0xff]
        %v618 = vld [vmem:[%s1 + $0x3b8] sm:$0xff]
        %v619 = vld [vmem:[%s1 + $0x3c0] sm:$0xff]
        %v620 = vld [vmem:[%s1 + $0x3c8] sm:$0xff]
        %v621 = vld [vmem:[%s1 + $0x3d0] sm:$0xff]
        %v622 = vld [vmem:[%s1 + $0x3d8] sm:$0xff]
        %v623 = vld [vmem:[%s1 + $0x3e0] sm:$0xff]
        %v624 = vld [vmem:[%s1 + $0x3e8] sm:$0xff]
        %v625 = vld [vmem:[%s1 + $0x3f0] sm:$0xff]
        %v626 = vld [vmem:[%s1 + $0x3f8] sm:$0xff]
        %v627 = vld [vmem:[%s1 + $0x400] sm:$0xff]
        %v628 = vld [vmem:[%s1 + $0x408] sm:$0xff]
        %v629 = vld [vmem:[%s1 + $0x410] sm:$0xff]
        %v630 = vld [vmem:[%s1 + $0x418] sm:$0xff]
        %v631 = vld [vmem:[%s1 + $0x420] sm:$0xff]
        %v632 = vld [vmem:[%s1 + $0x428] sm:$0xff]
        %v633 = vld [vmem:[%s1 + $0x430] sm:$0xff]
        %v634 = vld [vmem:[%s1 + $0x438] sm:$0xff]
        %v635 = vld [vmem:[%s1 + $0x440] sm:$0xff]
        %v636 = vld [vmem:[%s1 + $0x448] sm:$0xff]
        %v637 = vld [vmem:[%s1 + $0x450] sm:$0xff]
        %v638 = vld [vmem:[%s1 + $0x458] sm:$0xff]
        %v639 = vld [vmem:[%s1 + $0x460] sm:$0xff]
        %v640 = vld [vmem:[%s1 + $0x468] sm:$0xff]
        %v641 = vld [vmem:[%s1 + $0x470] sm:$0xff]
        %v642 = vld [vmem:[%s1 + $0x478] sm:$0xff]
        %643 = vmatprep.subr.mxu0 0.0
        %644 = vmatpush1.msra.mxu0 %v499
        %645 = vmatprep.subr.mxu0 0.0
        %646 = vmatpush1.msra.mxu0 %v500
        %647 = vmatprep.subr.mxu0 0.0
        %648 = vmatpush1.msra.mxu0 %v501
        %649 = vmatprep.subr.mxu0 0.0
        %650 = vmatpush1.msra.mxu0 %v502
        %651 = vmatprep.subr.mxu0 0.0
        %652 = vmatpush1.msra.mxu0 %v503
        %653 = vmatprep.subr.mxu0 0.0
        %654 = vmatpush1.msra.mxu0 %v504
        %655 = vmatprep.subr.mxu0 0.0
        %656 = vmatpush1.msra.mxu0 %v505
        %657 = vmatprep.subr.mxu0 0.0
        %658 = vmatpush1.msra.mxu0 %v506
        %659 = vmatprep.subr.mxu0 0.0
        %660 = vmatpush1.msra.mxu0 %v507
        %661 = vmatprep.subr.mxu0 0.0
        %662 = vmatpush1.msra.mxu0 %v508
        %663 = vmatprep.subr.mxu0 0.0
        %664 = vmatpush1.msra.mxu0 %v509
        %665 = vmatprep.subr.mxu0 0.0
        %666 = vmatpush1.msra.mxu0 %v510
        %667 = vmatprep.subr.mxu0 0.0
        %668 = vmatpush1.msra.mxu0 %v511
        %669 = vmatprep.subr.mxu0 0.0
        %670 = vmatpush1.msra.mxu0 %v512
        %671 = vmatprep.subr.mxu0 0.0
        %672 = vmatpush1.msra.mxu0 %v513
        %673 = vmatprep.subr.mxu0 0.0
        %674 = vmatpush1.msra.mxu0 %v514
        %675 = vmatprep.subr.mxu0 0.0
        %676 = vmatpush1.msra.mxu0 %v515
        %677 = vmatprep.subr.mxu0 0.0
        %678 = vmatpush1.msra.mxu0 %v516
        %679 = vmatprep.subr.mxu0 0.0
        %680 = vmatpush1.msra.mxu0 %v517
        %681 = vmatprep.subr.mxu0 0.0
        %682 = vmatpush1.msra.mxu0 %v518
        %683 = vmatprep.subr.mxu0 0.0
        %684 = vmatpush1.msra.mxu0 %v519
        %685 = vmatprep.subr.mxu0 0.0
        %686 = vmatpush1.msra.mxu0 %v520
        %687 = vmatprep.subr.mxu0 0.0
        %688 = vmatpush1.msra.mxu0 %v521
        %689 = vmatprep.subr.mxu0 0.0
        %690 = vmatpush1.msra.mxu0 %v522
        %691 = vmatprep.subr.mxu0 0.0
        %692 = vmatpush1.msra.mxu0 %v523
        %693 = vmatprep.subr.mxu0 0.0
        %694 = vmatpush1.msra.mxu0 %v524
        %695 = vmatprep.subr.mxu0 0.0
        %696 = vmatpush1.msra.mxu0 %v525
        %697 = vmatprep.subr.mxu0 0.0
        %698 = vmatpush1.msra.mxu0 %v526
        %699 = vmatprep.subr.mxu0 0.0
        %700 = vmatpush1.msra.mxu0 %v527
        %701 = vmatprep.subr.mxu0 0.0
        %702 = vmatpush1.msra.mxu0 %v528
        %703 = vmatprep.subr.mxu0 0.0
        %704 = vmatpush1.msra.mxu0 %v529
        %705 = vmatprep.subr.mxu0 0.0
        %706 = vmatpush1.msra.mxu0 %v530
        %707 = vmatprep.mubr.f32.mxu0 %v428
        %708 = vmatmul.mubr.f32.gmra.mrb[0].mxu0 %v427
        %v709 = vpop.f32.mrb[0].mxu0
        %v710 = vadd.f32 0.0, %v709
        %v711 = vpop.f32.mrb[0].mxu0
        %712 = vmatprep.mubr.f32.mxu0 %v437
        %713 = vmatmul.mubr.f32.gmra.mrb[0].mxu0 %v436
        %v714 = vpop.f32.mrb[0].mxu0
        %v715 = vadd.f32 0.0, %v714
        %v716 = vpop.f32.mrb[0].mxu0
        %717 = vmatprep.mubr.f32.mxu0 %v446
        %718 = vmatmul.mubr.f32.gmra.mrb[0].mxu0 %v445
        %v719 = vpop.f32.mrb[0].mxu0
        %v720 = vadd.f32 0.0, %v719
        %v721 = vpop.f32.mrb[0].mxu0
        %722 = vmatprep.mubr.f32.mxu0 %v455
        %723 = vmatmul.mubr.f32.gmra.mrb[0].mxu0 %v454
        %v724 = vpop.f32.mrb[0].mxu0
        %v725 = vadd.f32 0.0, %v724
        %v726 = vpop.f32.mrb[0].mxu0
        %727 = vmatprep.mubr.f32.mxu0 %v464
        %728 = vmatmul.mubr.f32.gmra.mrb[0].mxu0 %v463
        %v729 = vpop.f32.mrb[0].mxu0
        %v730 = vadd.f32 0.0, %v729
        %v731 = vpop.f32.mrb[0].mxu0
        %732 = vmatprep.mubr.f32.mxu0 %v473
        %733 = vmatmul.mubr.f32.gmra.mrb[0].mxu0 %v472
        %v734 = vpop.f32.mrb[0].mxu0
        %v735 = vadd.f32 0.0, %v734
        %v736 = vpop.f32.mrb[0].mxu0
        %737 = vmatprep.mubr.f32.mxu0 %v482
        %738 = vmatmul.mubr.f32.gmra.mrb[0].mxu0 %v481
        %v739 = vpop.f32.mrb[0].mxu0
        %v740 = vadd.f32 0.0, %v739
        %v741 = vpop.f32.mrb[0].mxu0
        %742 = vmatprep.mubr.f32.mxu0 %v491
        %743 = vmatmul.mubr.f32.gmra.mrb[0].mxu0 %v490
        %v744 = vpop.f32.mrb[0].mxu0
        %v745 = vadd.f32 0.0, %v744
        %v746 = vpop.f32.mrb[0].mxu0
        %747 = vdwg.mxu0
        %748 = vmatprep.subr.mxu0 0.0
        %749 = vmatpush1.msra.mxu0 %v531
        %750 = vmatprep.subr.mxu0 0.0
        %751 = vmatpush1.msra.mxu0 %v532
        %752 = vmatprep.subr.mxu0 0.0
        %753 = vmatpush1.msra.mxu0 %v533
        %754 = vmatprep.subr.mxu0 0.0
        %755 = vmatpush1.msra.mxu0 %v534
        %756 = vmatprep.subr.mxu0 0.0
        %757 = vmatpush1.msra.mxu0 %v535
        %758 = vmatprep.subr.mxu0 0.0
        %759 = vmatpush1.msra.mxu0 %v536
        %760 = vmatprep.subr.mxu0 0.0
        %761 = vmatpush1.msra.mxu0 %v537
        %762 = vmatprep.subr.mxu0 0.0
        %763 = vmatpush1.msra.mxu0 %v538
        %764 = vmatprep.subr.mxu0 0.0
        %765 = vmatpush1.msra.mxu0 %v539
        %766 = vmatprep.subr.mxu0 0.0
        %767 = vmatpush1.msra.mxu0 %v540
        %768 = vmatprep.subr.mxu0 0.0
        %769 = vmatpush1.msra.mxu0 %v541
        %770 = vmatprep.subr.mxu0 0.0
        %771 = vmatpush1.msra.mxu0 %v542
        %772 = vmatprep.subr.mxu0 0.0
        %773 = vmatpush1.msra.mxu0 %v543
        %774 = vmatprep.subr.mxu0 0.0
        %775 = vmatpush1.msra.mxu0 %v544
        %776 = vmatprep.subr.mxu0 0.0
        %777 = vmatpush1.msra.mxu0 %v545
        %778 = vmatprep.subr.mxu0 0.0
        %779 = vmatpush1.msra.mxu0 %v546
        %780 = vmatprep.subr.mxu0 0.0
        %781 = vmatpush1.msra.mxu0 %v547
        %782 = vmatprep.subr.mxu0 0.0
        %783 = vmatpush1.msra.mxu0 %v548
        %784 = vmatprep.subr.mxu0 0.0
        %785 = vmatpush1.msra.mxu0 %v549
        %786 = vmatprep.subr.mxu0 0.0
        %787 = vmatpush1.msra.mxu0 %v550
        %788 = vmatprep.subr.mxu0 0.0
        %789 = vmatpush1.msra.mxu0 %v551
        %790 = vmatprep.subr.mxu0 0.0
        %791 = vmatpush1.msra.mxu0 %v552
        %792 = vmatprep.subr.mxu0 0.0
        %793 = vmatpush1.msra.mxu0 %v553
        %794 = vmatprep.subr.mxu0 0.0
        %795 = vmatpush1.msra.mxu0 %v554
        %796 = vmatprep.subr.mxu0 0.0
        %797 = vmatpush1.msra.mxu0 %v555
        %798 = vmatprep.subr.mxu0 0.0
        %799 = vmatpush1.msra.mxu0 %v556
        %800 = vmatprep.subr.mxu0 0.0
        %801 = vmatpush1.msra.mxu0 %v557
        %802 = vmatprep.subr.mxu0 0.0
        %803 = vmatpush1.msra.mxu0 %v558
        %804 = vmatprep.subr.mxu0 0.0
        %805 = vmatpush1.msra.mxu0 %v559
        %806 = vmatprep.subr.mxu0 0.0
        %807 = vmatpush1.msra.mxu0 %v560
        %808 = vmatprep.subr.mxu0 0.0
        %809 = vmatpush1.msra.mxu0 %v561
        %810 = vmatprep.subr.mxu0 0.0
        %811 = vmatpush1.msra.mxu0 %v562
        %812 = vmatprep.mubr.f32.mxu0 %v430
        %813 = vmatmul.mubr.f32.gmra.mrb[0].mxu0 %v429
        %v814 = vpop.f32.mrb[0].mxu0
        %v815 = vadd.f32 %v710, %v814
        %v816 = vpop.f32.mrb[0].mxu0
        %817 = vmatprep.mubr.f32.mxu0 %v439
        %818 = vmatmul.mubr.f32.gmra.mrb[0].mxu0 %v438
        %v819 = vpop.f32.mrb[0].mxu0
        %v820 = vadd.f32 %v715, %v819
        %v821 = vpop.f32.mrb[0].mxu0
        %822 = vmatprep.mubr.f32.mxu0 %v448
        %823 = vmatmul.mubr.f32.gmra.mrb[0].mxu0 %v447
        %v824 = vpop.f32.mrb[0].mxu0
        %v825 = vadd.f32 %v720, %v824
        %v826 = vpop.f32.mrb[0].mxu0
        %827 = vmatprep.mubr.f32.mxu0 %v457
        %828 = vmatmul.mubr.f32.gmra.mrb[0].mxu0 %v456
        %v829 = vpop.f32.mrb[0].mxu0
        %v830 = vadd.f32 %v725, %v829
        %v831 = vpop.f32.mrb[0].mxu0
        %832 = vmatprep.mubr.f32.mxu0 %v466
        %833 = vmatmul.mubr.f32.gmra.mrb[0].mxu0 %v465
        %v834 = vpop.f32.mrb[0].mxu0
        %v835 = vadd.f32 %v730, %v834
        %v836 = vpop.f32.mrb[0].mxu0
        %837 = vmatprep.mubr.f32.mxu0 %v475
        %838 = vmatmul.mubr.f32.gmra.mrb[0].mxu0 %v474
        %v839 = vpop.f32.mrb[0].mxu0
        %v840 = vadd.f32 %v735, %v839
        %v841 = vpop.f32.mrb[0].mxu0
        %842 = vmatprep.mubr.f32.mxu0 %v484
        %843 = vmatmul.mubr.f32.gmra.mrb[0].mxu0 %v483
        %v844 = vpop.f32.mrb[0].mxu0
        %v845 = vadd.f32 %v740, %v844
        %v846 = vpop.f32.mrb[0].mxu0
        %847 = vmatprep.mubr.f32.mxu0 %v493
        %848 = vmatmul.mubr.f32.gmra.mrb[0].mxu0 %v492
        %v849 = vpop.f32.mrb[0].mxu0
        %v850 = vadd.f32 %v745, %v849
        %v851 = vpop.f32.mrb[0].mxu0
        %852 = vdwg.mxu0
        %853 = vmatprep.subr.mxu0 0.0
        %854 = vmatpush1.msra.mxu0 %v563
        %855 = vmatprep.subr.mxu0 0.0
        %856 = vmatpush1.msra.mxu0 %v564
        %857 = vmatprep.subr.mxu0 0.0
        %858 = vmatpush1.msra.mxu0 %v565
        %859 = vmatprep.subr.mxu0 0.0
        %860 = vmatpush1.msra.mxu0 %v566
        %861 = vmatprep.subr.mxu0 0.0
        %862 = vmatpush1.msra.mxu0 %v567
        %863 = vmatprep.subr.mxu0 0.0
        %864 = vmatpush1.msra.mxu0 %v568
        %865 = vmatprep.subr.mxu0 0.0
        %866 = vmatpush1.msra.mxu0 %v569
        %867 = vmatprep.subr.mxu0 0.0
        %868 = vmatpush1.msra.mxu0 %v570
        %869 = vmatprep.subr.mxu0 0.0
        %870 = vmatpush1.msra.mxu0 %v571
        %871 = vmatprep.subr.mxu0 0.0
        %872 = vmatpush1.msra.mxu0 %v572
        %873 = vmatprep.subr.mxu0 0.0
        %874 = vmatpush1.msra.mxu0 %v573
        %875 = vmatprep.subr.mxu0 0.0
        %876 = vmatpush1.msra.mxu0 %v574
        %877 = vmatprep.subr.mxu0 0.0
        %878 = vmatpush1.msra.mxu0 %v575
        %879 = vmatprep.subr.mxu0 0.0
        %880 = vmatpush1.msra.mxu0 %v576
        %881 = vmatprep.subr.mxu0 0.0
        %882 = vmatpush1.msra.mxu0 %v577
        %883 = vmatprep.subr.mxu0 0.0
        %884 = vmatpush1.msra.mxu0 %v578
        %885 = vmatprep.subr.mxu0 0.0
        %886 = vmatpush1.msra.mxu0 %v579
        %887 = vmatprep.subr.mxu0 0.0
        %888 = vmatpush1.msra.mxu0 %v580
        %889 = vmatprep.subr.mxu0 0.0
        %890 = vmatpush1.msra.mxu0 %v581
        %891 = vmatprep.subr.mxu0 0.0
        %892 = vmatpush1.msra.mxu0 %v582
        %893 = vmatprep.subr.mxu0 0.0
        %894 = vmatpush1.msra.mxu0 %v583
        %895 = vmatprep.subr.mxu0 0.0
        %896 = vmatpush1.msra.mxu0 %v584
        %897 = vmatprep.subr.mxu0 0.0
        %898 = vmatpush1.msra.mxu0 %v585
        %899 = vmatprep.subr.mxu0 0.0
        %900 = vmatpush1.msra.mxu0 %v586
        %901 = vmatprep.subr.mxu0 0.0
        %902 = vmatpush1.msra.mxu0 %v587
        %903 = vmatprep.subr.mxu0 0.0
        %904 = vmatpush1.msra.mxu0 %v588
        %905 = vmatprep.subr.mxu0 0.0
        %906 = vmatpush1.msra.mxu0 %v589
        %907 = vmatprep.subr.mxu0 0.0
        %908 = vmatpush1.msra.mxu0 %v590
        %909 = vmatprep.subr.mxu0 0.0
        %910 = vmatpush1.msra.mxu0 %v591
        %911 = vmatprep.subr.mxu0 0.0
        %912 = vmatpush1.msra.mxu0 %v592
        %913 = vmatprep.subr.mxu0 0.0
        %914 = vmatpush1.msra.mxu0 %v593
        %915 = vmatprep.subr.mxu0 0.0
        %916 = vmatpush1.msra.mxu0 %v594
        %917 = vmatprep.mubr.f32.mxu0 %v432
        %918 = vmatmul.mubr.f32.gmra.mrb[0].mxu0 %v431
        %v919 = vpop.f32.mrb[0].mxu0
        %v920 = vadd.f32 %v815, %v919
        %v921 = vpop.f32.mrb[0].mxu0
        %922 = vmatprep.mubr.f32.mxu0 %v441
        %923 = vmatmul.mubr.f32.gmra.mrb[0].mxu0 %v440
        %v924 = vpop.f32.mrb[0].mxu0
        %v925 = vadd.f32 %v820, %v924
        %v926 = vpop.f32.mrb[0].mxu0
        %927 = vmatprep.mubr.f32.mxu0 %v450
        %928 = vmatmul.mubr.f32.gmra.mrb[0].mxu0 %v449
        %v929 = vpop.f32.mrb[0].mxu0
        %v930 = vadd.f32 %v825, %v929
        %v931 = vpop.f32.mrb[0].mxu0
        %932 = vmatprep.mubr.f32.mxu0 %v459
        %933 = vmatmul.mubr.f32.gmra.mrb[0].mxu0 %v458
        %v934 = vpop.f32.mrb[0].mxu0
        %v935 = vadd.f32 %v830, %v934
        %v936 = vpop.f32.mrb[0].mxu0
        %937 = vmatprep.mubr.f32.mxu0 %v468
        %938 = vmatmul.mubr.f32.gmra.mrb[0].mxu0 %v467
        %v939 = vpop.f32.mrb[0].mxu0
        %v940 = vadd.f32 %v835, %v939
        %v941 = vpop.f32.mrb[0].mxu0
        %942 = vmatprep.mubr.f32.mxu0 %v477
        %943 = vmatmul.mubr.f32.gmra.mrb[0].mxu0 %v476
        %v944 = vpop.f32.mrb[0].mxu0
        %v945 = vadd.f32 %v840, %v944
        %v946 = vpop.f32.mrb[0].mxu0
        %947 = vmatprep.mubr.f32.mxu0 %v486
        %948 = vmatmul.mubr.f32.gmra.mrb[0].mxu0 %v485
        %v949 = vpop.f32.mrb[0].mxu0
        %v950 = vadd.f32 %v845, %v949
        %v951 = vpop.f32.mrb[0].mxu0
        %952 = vmatprep.mubr.f32.mxu0 %v495
        %953 = vmatmul.mubr.f32.gmra.mrb[0].mxu0 %v494
        %v954 = vpop.f32.mrb[0].mxu0
        %v955 = vadd.f32 %v850, %v954
        %v956 = vpop.f32.mrb[0].mxu0
        %957 = vdwg.mxu0
        %958 = vmatprep.subr.mxu0 0.0
        %959 = vmatpush1.msra.mxu0 %v595
        %960 = vmatprep.subr.mxu0 0.0
        %961 = vmatpush1.msra.mxu0 %v596
        %962 = vmatprep.subr.mxu0 0.0
        %963 = vmatpush1.msra.mxu0 %v597
        %964 = vmatprep.subr.mxu0 0.0
        %965 = vmatpush1.msra.mxu0 %v598
        %966 = vmatprep.subr.mxu0 0.0
        %967 = vmatpush1.msra.mxu0 %v599
        %968 = vmatprep.subr.mxu0 0.0
        %969 = vmatpush1.msra.mxu0 %v600
        %970 = vmatprep.subr.mxu0 0.0
        %971 = vmatpush1.msra.mxu0 %v601
        %972 = vmatprep.subr.mxu0 0.0
        %973 = vmatpush1.msra.mxu0 %v602
        %974 = vmatprep.subr.mxu0 0.0
        %975 = vmatpush1.msra.mxu0 %v603
        %976 = vmatprep.subr.mxu0 0.0
        %977 = vmatpush1.msra.mxu0 %v604
        %978 = vmatprep.subr.mxu0 0.0
        %979 = vmatpush1.msra.mxu0 %v605
        %980 = vmatprep.subr.mxu0 0.0
        %981 = vmatpush1.msra.mxu0 %v606
        %982 = vmatprep.subr.mxu0 0.0
        %983 = vmatpush1.msra.mxu0 %v607
        %984 = vmatprep.subr.mxu0 0.0
        %985 = vmatpush1.msra.mxu0 %v608
        %986 = vmatprep.subr.mxu0 0.0
        %987 = vmatpush1.msra.mxu0 %v609
        %988 = vmatprep.subr.mxu0 0.0
        %989 = vmatpush1.msra.mxu0 %v610
        %990 = vmatprep.subr.mxu0 0.0
        %991 = vmatpush1.msra.mxu0 %v611
        %992 = vmatprep.subr.mxu0 0.0
        %993 = vmatpush1.msra.mxu0 %v612
        %994 = vmatprep.subr.mxu0 0.0
        %995 = vmatpush1.msra.mxu0 %v613
        %996 = vmatprep.subr.mxu0 0.0
        %997 = vmatpush1.msra.mxu0 %v614
        %998 = vmatprep.subr.mxu0 0.0
        %999 = vmatpush1.msra.mxu0 %v615
        %1000 = vmatprep.subr.mxu0 0.0
        %1001 = vmatpush1.msra.mxu0 %v616
        %1002 = vmatprep.subr.mxu0 0.0
        %1003 = vmatpush1.msra.mxu0 %v617
        %1004 = vmatprep.subr.mxu0 0.0
        %1005 = vmatpush1.msra.mxu0 %v618
        %1006 = vmatprep.subr.mxu0 0.0
        %1007 = vmatpush1.msra.mxu0 %v619
        %1008 = vmatprep.subr.mxu0 0.0
        %1009 = vmatpush1.msra.mxu0 %v620
        %1010 = vmatprep.subr.mxu0 0.0
        %1011 = vmatpush1.msra.mxu0 %v621
        %1012 = vmatprep.subr.mxu0 0.0
        %1013 = vmatpush1.msra.mxu0 %v622
        %1014 = vmatprep.subr.mxu0 0.0
        %1015 = vmatpush1.msra.mxu0 %v623
        %1016 = vmatprep.subr.mxu0 0.0
        %1017 = vmatpush1.msra.mxu0 %v624
        %1018 = vmatprep.subr.mxu0 0.0
        %1019 = vmatpush1.msra.mxu0 %v625
        %1020 = vmatprep.subr.mxu0 0.0
        %1021 = vmatpush1.msra.mxu0 %v626
        %1022 = vmatprep.mubr.f32.mxu0 %v434
        %1023 = vmatmul.mubr.f32.gmra.mrb[0].mxu0 %v433
        %v1024 = vpop.f32.mrb[0].mxu0
        %v1025 = vadd.f32 %v920, %v1024
        %v1026 = vpop.f32.mrb[0].mxu0
        %1027 = vmatprep.mubr.f32.mxu0 %v443
        %1028 = vmatmul.mubr.f32.gmra.mrb[0].mxu0 %v442
        %v1029 = vpop.f32.mrb[0].mxu0
        %v1030 = vadd.f32 %v925, %v1029
        %v1031 = vpop.f32.mrb[0].mxu0
        %1032 = vmatprep.mubr.f32.mxu0 %v452
        %1033 = vmatmul.mubr.f32.gmra.mrb[0].mxu0 %v451
        %v1034 = vpop.f32.mrb[0].mxu0
        %v1035 = vadd.f32 %v930, %v1034
        %v1036 = vpop.f32.mrb[0].mxu0
        %1037 = vmatprep.mubr.f32.mxu0 %v461
        %1038 = vmatmul.mubr.f32.gmra.mrb[0].mxu0 %v460
        %v1039 = vpop.f32.mrb[0].mxu0
        %v1040 = vadd.f32 %v935, %v1039
        %v1041 = vpop.f32.mrb[0].mxu0
        %1042 = vmatprep.mubr.f32.mxu0 %v470
        %1043 = vmatmul.mubr.f32.gmra.mrb[0].mxu0 %v469
        %v1044 = vpop.f32.mrb[0].mxu0
        %v1045 = vadd.f32 %v940, %v1044
        %v1046 = vpop.f32.mrb[0].mxu0
        %1047 = vmatprep.mubr.f32.mxu0 %v479
        %1048 = vmatmul.mubr.f32.gmra.mrb[0].mxu0 %v478
        %v1049 = vpop.f32.mrb[0].mxu0
        %v1050 = vadd.f32 %v945, %v1049
        %v1051 = vpop.f32.mrb[0].mxu0
        %1052 = vmatprep.mubr.f32.mxu0 %v488
        %1053 = vmatmul.mubr.f32.gmra.mrb[0].mxu0 %v487
        %v1054 = vpop.f32.mrb[0].mxu0
        %v1055 = vadd.f32 %v950, %v1054
        %v1056 = vpop.f32.mrb[0].mxu0
        %1057 = vmatprep.mubr.f32.mxu0 %v497
        %1058 = vmatmul.mubr.f32.gmra.mrb[0].mxu0 %v496
        %v1059 = vpop.f32.mrb[0].mxu0
        %v1060 = vadd.f32 %v955, %v1059
        %v1061 = vpop.f32.mrb[0].mxu0
        %1062 = vdwg.mxu0
        %1063 = vmatprep.subr.mxu0 0.0
        %1064 = vmatpush1.msra.mxu0 %v627
        %1065 = vmatprep.subr.mxu0 0.0
        %1066 = vmatpush1.msra.mxu0 %v628
        %1067 = vmatprep.subr.mxu0 0.0
        %1068 = vmatpush1.msra.mxu0 %v629
        %1069 = vmatprep.subr.mxu0 0.0
        %1070 = vmatpush1.msra.mxu0 %v630
        %1071 = vmatprep.subr.mxu0 0.0
        %1072 = vmatpush1.msra.mxu0 %v631
        %1073 = vmatprep.subr.mxu0 0.0
        %1074 = vmatpush1.msra.mxu0 %v632
        %1075 = vmatprep.subr.mxu0 0.0
        %1076 = vmatpush1.msra.mxu0 %v633
        %1077 = vmatprep.subr.mxu0 0.0
        %1078 = vmatpush1.msra.mxu0 %v634
        %1079 = vmatprep.subr.mxu0 0.0
        %1080 = vmatpush1.msra.mxu0 %v635
        %1081 = vmatprep.subr.mxu0 0.0
        %1082 = vmatpush1.msra.mxu0 %v636
        %1083 = vmatprep.subr.mxu0 0.0
        %1084 = vmatpush1.msra.mxu0 %v637
        %1085 = vmatprep.subr.mxu0 0.0
        %1086 = vmatpush1.msra.mxu0 %v638
        %1087 = vmatprep.subr.mxu0 0.0
        %1088 = vmatpush1.msra.mxu0 %v639
        %1089 = vmatprep.subr.mxu0 0.0
        %1090 = vmatpush1.msra.mxu0 %v640
        %1091 = vmatprep.subr.mxu0 0.0
        %1092 = vmatpush1.msra.mxu0 %v641
        %1093 = vmatprep.subr.mxu0 0.0
        %1094 = vmatpush1.msra.mxu0 %v642
        %1095 = vmatprep.subr.mxu0 0.0
        %1096 = vmatpush1.msra.mxu0 0.0
        %1097 = vmatprep.subr.mxu0 0.0
        %1098 = vmatpush1.msra.mxu0 0.0
        %1099 = vmatprep.subr.mxu0 0.0
        %1100 = vmatpush1.msra.mxu0 0.0
        %1101 = vmatprep.subr.mxu0 0.0
        %1102 = vmatpush1.msra.mxu0 0.0
        %1103 = vmatprep.subr.mxu0 0.0
        %1104 = vmatpush1.msra.mxu0 0.0
        %1105 = vmatprep.subr.mxu0 0.0
        %1106 = vmatpush1.msra.mxu0 0.0
        %1107 = vmatprep.subr.mxu0 0.0
        %1108 = vmatpush1.msra.mxu0 0.0
        %1109 = vmatprep.subr.mxu0 0.0
        %1110 = vmatpush1.msra.mxu0 0.0
        %1111 = vmatprep.subr.mxu0 0.0
        %1112 = vmatpush1.msra.mxu0 0.0
        %1113 = vmatprep.subr.mxu0 0.0
        %1114 = vmatpush1.msra.mxu0 0.0
        %1115 = vmatprep.subr.mxu0 0.0
        %1116 = vmatpush1.msra.mxu0 0.0
        %1117 = vmatprep.subr.mxu0 0.0
        %1118 = vmatpush1.msra.mxu0 0.0
        %1119 = vmatprep.subr.mxu0 0.0
        %1120 = vmatpush1.msra.mxu0 0.0
        %1121 = vmatprep.subr.mxu0 0.0
        %1122 = vmatpush1.msra.mxu0 0.0
        %1123 = vmatprep.subr.mxu0 0.0
        %1124 = vmatpush1.msra.mxu0 0.0
        %1125 = vmatprep.subr.mxu0 0.0
        %1126 = vmatpush1.msra.mxu0 0.0
        %1127 = vmatprep.mubr.f32.mxu0 0.0
        %1128 = vmatmul.mubr.f32.gmra.mrb[0].mxu0 %v435
        %v1129 = vpop.f32.mrb[0].mxu0
        %v1130 = vadd.f32 %v1025, %v1129
        %v1131 = vpop.f32.mrb[0].mxu0
        %1132 = vmatprep.mubr.f32.mxu0 0.0
        %1133 = vmatmul.mubr.f32.gmra.mrb[0].mxu0 %v444
        %v1134 = vpop.f32.mrb[0].mxu0
        %v1135 = vadd.f32 %v1030, %v1134
        %v1136 = vpop.f32.mrb[0].mxu0
        %1137 = vmatprep.mubr.f32.mxu0 0.0
        %1138 = vmatmul.mubr.f32.gmra.mrb[0].mxu0 %v453
        %v1139 = vpop.f32.mrb[0].mxu0
        %v1140 = vadd.f32 %v1035, %v1139
        %v1141 = vpop.f32.mrb[0].mxu0
        %1142 = vmatprep.mubr.f32.mxu0 0.0
        %1143 = vmatmul.mubr.f32.gmra.mrb[0].mxu0 %v462
        %v1144 = vpop.f32.mrb[0].mxu0
        %v1145 = vadd.f32 %v1040, %v1144
        %v1146 = vpop.f32.mrb[0].mxu0
        %1147 = vmatprep.mubr.f32.mxu0 0.0
        %1148 = vmatmul.mubr.f32.gmra.mrb[0].mxu0 %v471
        %v1149 = vpop.f32.mrb[0].mxu0
        %v1150 = vadd.f32 %v1045, %v1149
        %v1151 = vpop.f32.mrb[0].mxu0
        %1152 = vmatprep.mubr.f32.mxu0 0.0
        %1153 = vmatmul.mubr.f32.gmra.mrb[0].mxu0 %v480
        %v1154 = vpop.f32.mrb[0].mxu0
        %v1155 = vadd.f32 %v1050, %v1154
        %v1156 = vpop.f32.mrb[0].mxu0
        %1157 = vmatprep.mubr.f32.mxu0 0.0
        %1158 = vmatmul.mubr.f32.gmra.mrb[0].mxu0 %v489
        %v1159 = vpop.f32.mrb[0].mxu0
        %v1160 = vadd.f32 %v1055, %v1159
        %v1161 = vpop.f32.mrb[0].mxu0
        %1162 = vmatprep.mubr.f32.mxu0 0.0
        %1163 = vmatmul.mubr.f32.gmra.mrb[0].mxu0 %v498
        %v1164 = vpop.f32.mrb[0].mxu0
        %v1165 = vadd.f32 %v1060, %v1164
        %v1166 = vpop.f32.mrb[0].mxu0
        %1167 = vdwg.mxu0
        %1168 = vst [vmem:[%s251] sm:$0xff] %v1130
        %1169 = vst [vmem:[%s251 + $0x8] sm:$0xff] %v1135
        %1170 = vst [vmem:[%s251 + $0x10] sm:$0xff] %v1140
        %1171 = vst [vmem:[%s251 + $0x18] sm:$0xff] %v1145
        %1172 = vst [vmem:[%s251 + $0x20] sm:$0xff] %v1150
        %1173 = vst [vmem:[%s251 + $0x28] sm:$0xff] %v1155
        %1174 = vst [vmem:[%s251 + $0x30] sm:$0xff] %v1160
        %1175 = vst [vmem:[%s251 + $0x38] sm:$0xff] %v1165
        %v1176 = vadd.f32 %v1130, %v1135
        %v1177 = vadd.f32 %v1176, %v1140
        %v1178 = vadd.f32 %v1177, %v1145
        %v1179 = vadd.f32 %v1178, %v1150
        %v1180 = vadd.f32 %v1179, %v1155
        %v1181 = vadd.f32 %v1180, %v1160
        %v1182 = vadd.f32 %v1181, %v1165
        %v1183 = vrot.slane %v1182, 4
        %v1184 = vadd.f32 %v1182, %v1183
        %v1185 = vrot.slane %v1184, 2
        %v1186 = vadd.f32 %v1184, %v1185
        %v1187 = vrot.slane %v1186, 1
        %v1188 = vadd.f32 %v1186, %v1187
        %v1189 = vmul.f32 %v1188, 0.015625
        %1190 = vst [vmem:[%s258] sm:$0x1] %v1189
        %v1191 = vsub.f32 %v1130, %v1189
        %v1192 = vsub.f32 %v1135, %v1189
        %v1193 = vsub.f32 %v1140, %v1189
        %v1194 = vsub.f32 %v1145, %v1189
        %v1195 = vsub.f32 %v1150, %v1189
        %v1196 = vsub.f32 %v1155, %v1189
        %v1197 = vsub.f32 %v1160, %v1189
        %v1198 = vsub.f32 %v1165, %v1189
        %v1199 = vmul.f32 %v1191, %v1191
        %v1200 = vmul.f32 %v1192, %v1192
        %v1201 = vmul.f32 %v1193, %v1193
        %v1202 = vmul.f32 %v1194, %v1194
        %v1203 = vmul.f32 %v1195, %v1195
        %v1204 = vmul.f32 %v1196, %v1196
        %v1205 = vmul.f32 %v1197, %v1197
        %v1206 = vmul.f32 %v1198, %v1198
        %v1207 = vadd.f32 %v1199, %v1200
        %v1208 = vadd.f32 %v1207, %v1201
        %v1209 = vadd.f32 %v1208, %v1202
        %v1210 = vadd.f32 %v1209, %v1203
        %v1211 = vadd.f32 %v1210, %v1204
        %v1212 = vadd.f32 %v1211, %v1205
        %v1213 = vadd.f32 %v1212, %v1206
        %v1214 = vrot.slane %v1213, 4
        %v1215 = vadd.f32 %v1213, %v1214
        %v1216 = vrot.slane %v1215, 2
        %v1217 = vadd.f32 %v1215, %v1216
        %v1218 = vrot.slane %v1217, 1
        %v1219 = vadd.f32 %v1217, %v1218
        %1220 = vst [vmem:[%s258 + $0x1] sm:$0x1] %v1219
        %v1221 = vld [vmem:[#allocation2 + $0x20] sm:$0xff]
        %v1222 = vld [vmem:[#allocation2 + $0x68] sm:$0xff]
        %v1223 = vld [vmem:[#allocation2 + $0xb0] sm:$0xff]
        %v1224 = vld [vmem:[#allocation2 + $0xf8] sm:$0xff]
        %v1225 = vld [vmem:[#allocation2 + $0x140] sm:$0xff]
        %v1226 = vld [vmem:[#allocation2 + $0x188] sm:$0xff]
        %v1227 = vld [vmem:[#allocation2 + $0x1d0] sm:$0xff]
        %v1228 = vld [vmem:[#allocation2 + $0x218] sm:$0xff]
        %v1229 = vld [vmem:[%s2] sm:$0xff]
        %v1230 = vld [vmem:[%s2 + $0x8] sm:$0xff]
        %v1231 = vld [vmem:[%s2 + $0x10] sm:$0xff]
        %v1232 = vld [vmem:[%s2 + $0x18] sm:$0xff]
        %v1233 = vld [vmem:[%s2 + $0x20] sm:$0xff]
        %v1234 = vld [vmem:[%s2 + $0x28] sm:$0xff]
        %v1235 = vld [vmem:[%s2 + $0x30] sm:$0xff]
        %v1236 = vld [vmem:[%s2 + $0x38] sm:$0xff]
        %v1237 = vld [vmem:[%s2 + $0x40] sm:$0xff]
        %v1238 = vld [vmem:[%s2 + $0x48] sm:$0xff]
        %v1239 = vld [vmem:[%s2 + $0x50] sm:$0xff]
        %v1240 = vld [vmem:[%s2 + $0x58] sm:$0xff]
        %v1241 = vld [vmem:[%s2 + $0x60] sm:$0xff]
        %v1242 = vld [vmem:[%s2 + $0x68] sm:$0xff]
        %v1243 = vld [vmem:[%s2 + $0x70] sm:$0xff]
        %v1244 = vld [vmem:[%s2 + $0x78] sm:$0xff]
        %1245 = vmatprep.subr.mxu0 0.0
        %1246 = vmatpush1.msra.mxu0 %v1229
        %1247 = vmatprep.subr.mxu0 0.0
        %1248 = vmatpush1.msra.mxu0 %v1230
        %1249 = vmatprep.subr.mxu0 0.0
        %1250 = vmatpush1.msra.mxu0 %v1231
        %1251 = vmatprep.subr.mxu0 0.0
        %1252 = vmatpush1.msra.mxu0 %v1232
        %1253 = vmatprep.subr.mxu0 0.0
        %1254 = vmatpush1.msra.mxu0 %v1233
        %1255 = vmatprep.subr.mxu0 0.0
        %1256 = vmatpush1.msra.mxu0 %v1234
        %1257 = vmatprep.subr.mxu0 0.0
        %1258 = vmatpush1.msra.mxu0 %v1235
        %1259 = vmatprep.subr.mxu0 0.0
        %1260 = vmatpush1.msra.mxu0 %v1236
        %1261 = vmatprep.subr.mxu0 0.0
        %1262 = vmatpush1.msra.mxu0 %v1237
        %1263 = vmatprep.subr.mxu0 0.0
        %1264 = vmatpush1.msra.mxu0 %v1238
        %1265 = vmatprep.subr.mxu0 0.0
        %1266 = vmatpush1.msra.mxu0 %v1239
        %1267 = vmatprep.subr.mxu0 0.0
        %1268 = vmatpush1.msra.mxu0 %v1240
        %1269 = vmatprep.subr.mxu0 0.0
        %1270 = vmatpush1.msra.mxu0 %v1241
        %1271 = vmatprep.subr.mxu0 0.0
        %1272 = vmatpush1.msra.mxu0 %v1242
        %1273 = vmatprep.subr.mxu0 0.0
        %1274 = vmatpush1.msra.mxu0 %v1243
        %1275 = vmatprep.subr.mxu0 0.0
        %1276 = vmatpush1.msra.mxu0 %v1244
        %1277 = vmatprep.subr.mxu0 0.0
        %1278 = vmatpush1.msra.mxu0 0.0
        %1279 = vmatprep.subr.mxu0 0.0
        %1280 = vmatpush1.msra.mxu0 0.0
        %1281 = vmatprep.subr.mxu0 0.0
        %1282 = vmatpush1.msra.mxu0 0.0
        %1283 = vmatprep.subr.mxu0 0.0
        %1284 = vmatpush1.msra.mxu0 0.0
        %1285 = vmatprep.subr.mxu0 0.0
        %1286 = vmatpush1.msra.mxu0 0.0
        %1287 = vmatprep.subr.mxu0 0.0
        %1288 = vmatpush1.msra.mxu0 0.0
        %1289 = vmatprep.subr.mxu0 0.0
        %1290 = vmatpush1.msra.mxu0 0.0
        %1291 = vmatprep.subr.mxu0 0.0
        %1292 = vmatpush1.msra.mxu0 0.0
        %1293 = vmatprep.subr.mxu0 0.0
        %1294 = vmatpush1.msra.mxu0 0.0
        %1295 = vmatprep.subr.mxu0 0.0
        %1296 = vmatpush1.msra.mxu0 0.0
        %1297 = vmatprep.subr.mxu0 0.0
        %1298 = vmatpush1.msra.mxu0 0.0
        %1299 = vmatprep.subr.mxu0 0.0
        %1300 = vmatpush1.msra.mxu0 0.0
        %1301 = vmatprep.subr.mxu0 0.0
        %1302 = vmatpush1.msra.mxu0 0.0
        %1303 = vmatprep.subr.mxu0 0.0
        %1304 = vmatpush1.msra.mxu0 0.0
        %1305 = vmatprep.subr.mxu0 0.0
        %1306 = vmatpush1.msra.mxu0 0.0
        %1307 = vmatprep.subr.mxu0 0.0
        %1308 = vmatpush1.msra.mxu0 0.0
        %1309 = vmatprep.mubr.f32.mxu0 0.0
        %1310 = vmatmul.mubr.f32.gmra.mrb[0].mxu0 %v1221
        %v1311 = vpop.f32.mrb[0].mxu0
        %v1312 = vadd.f32 0.0, %v1311
        %v1313 = vpop.f32.mrb[0].mxu0
        %1314 = vmatprep.mubr.f32.mxu0 0.0
        %1315 = vmatmul.mubr.f32.gmra.mrb[0].mxu0 %v1222
        %v1316 = vpop.f32.mrb[0].mxu0
        %v1317 = vadd.f32 0.0, %v1316
        %v1318 = vpop.f32.mrb[0].mxu0
        %1319 = vmatprep.mubr.f32.mxu0 0.0
        %1320 = vmatmul.mubr.f32.gmra.mrb[0].mxu0 %v1223
        %v1321 = vpop.f32.mrb[0].mxu0
        %v1322 = vadd.f32 0.0, %v1321
        %v1323 = vpop.f32.mrb[0].mxu0
        %1324 = vmatprep.mubr.f32.mxu0 0.0
        %1325 = vmatmul.mubr.f32.gmra.mrb[0].mxu0 %v1224
        %v1326 = vpop.f32.mrb[0].mxu0
        %v1327 = vadd.f32 0.0, %v1326
        %v1328 = vpop.f32.mrb[0].mxu0
        %1329 = vmatprep.mubr.f32.mxu0 0.0
        %1330 = vmatmul.mubr.f32.gmra.mrb[0].mxu0 %v1225
        %v1331 = vpop.f32.mrb[0].mxu0
        %v1332 = vadd.f32 0.0, %v1331
        %v1333 = vpop.f32.mrb[0].mxu0
        %1334 = vmatprep.mubr.f32.mxu0 0.0
        %1335 = vmatmul.mubr.f32.gmra.mrb[0].mxu0 %v1226
        %v1336 = vpop.f32.mrb[0].mxu0
        %v1337 = vadd.f32 0.0, %v1336
        %v1338 = vpop.f32.mrb[0].mxu0
        %1339 = vmatprep.mubr.f32.mxu0 0.0
        %1340 = vmatmul.mubr.f32.gmra.mrb[0].mxu0 %v1227
        %v1341 = vpop.f32.mrb[0].mxu0
        %v1342 = vadd.f32 0.0, %v1341
        %v1343 = vpop.f32.mrb[0].mxu0
        %1344 = vmatprep.mubr.f32.mxu0 0.0
        %1345 = vmatmul.mubr.f32.gmra.mrb[0].mxu0 %v1228
        %v1346 = vpop.f32.mrb[0].mxu0
        %v1347 = vadd.f32 0.0, %v1346
        %v1348 = vpop.f32.mrb[0].mxu0
        %1349 = vdwg.mxu0
        %1350 = vst [vmem:[%s265] sm:$0xff] %v1312
        %1351 = vst [vmem:[%s265 + $0x8] sm:$0xff] %v1317
        %1352 = vst [vmem:[%s265 + $0x10] sm:$0xff] %v1322
        %1353 = vst [vmem:[%s265 + $0x18] sm:$0xff] %v1327
        %1354 = vst [vmem:[%s265 + $0x20] sm:$0xff] %v1332
        %1355 = vst [vmem:[%s265 + $0x28] sm:$0xff] %v1337
        %1356 = vst [vmem:[%s265 + $0x30] sm:$0xff] %v1342
        %1357 = vst [vmem:[%s265 + $0x38] sm:$0xff] %v1347
        %v1358 = vadd.f32 %v1312, %v1317
        %v1359 = vadd.f32 %v1358, %v1322
        %v1360 = vadd.f32 %v1359, %v1327
        %v1361 = vadd.f32 %v1360, %v1332
        %v1362 = vadd.f32 %v1361, %v1337
        %v1363 = vadd.f32 %v1362, %v1342
        %v1364 = vadd.f32 %v1363, %v1347
        %v1365 = vrot.slane %v1364, 4
        %v1366 = vadd.f32 %v1364, %v1365
        %v1367 = vrot.slane %v1366, 2
        %v1368 = vadd.f32 %v1366, %v1367
        %v1369 = vrot.slane %v1368, 1
        %v1370 = vadd.f32 %v1368, %v1369
        %v1371 = vmul.f32 %v1370, 0.015625
        %1372 = vst [vmem:[%s272] sm:$0x1] %v1371
        %v1373 = vsub.f32 %v1312, %v1371
        %v1374 = vsub.f32 %v1317, %v1371
        %v1375 = vsub.f32 %v1322, %v1371
        %v1376 = vsub.f32 %v1327, %v1371
        %v1377 = vsub.f32 %v1332, %v1371
        %v1378 = vsub.f32 %v1337, %v1371
        %v1379 = vsub.f32 %v1342, %v1371
        %v1380 = vsub.f32 %v1347, %v1371
        %v1381 = vmul.f32 %v1373, %v1373
        %v1382 = vmul.f32 %v1374, %v1374
        %v1383 = vmul.f32 %v1375, %v1375
        %v1384 = vmul.f32 %v1376, %v1376
        %v1385 = vmul.f32 %v1377, %v1377
        %v1386 = vmul.f32 %v1378, %v1378
        %v1387 = vmul.f32 %v1379, %v1379
        %v1388 = vmul.f32 %v1380, %v1380
        %v1389 = vadd.f32 %v1381, %v1382
        %v1390 = vadd.f32 %v1389, %v1383
        %v1391 = vadd.f32 %v1390, %v1384
        %v1392 = vadd.f32 %v1391, %v1385
        %v1393 = vadd.f32 %v1392, %v1386
        %v1394 = vadd.f32 %v1393, %v1387
        %v1395 = vadd.f32 %v1394, %v1388
        %v1396 = vrot.slane %v1395, 4
        %v1397 = vadd.f32 %v1395, %v1396
        %v1398 = vrot.slane %v1397, 2
        %v1399 = vadd.f32 %v1397, %v1398
        %v1400 = vrot.slane %v1399, 1
        %v1401 = vadd.f32 %v1399, %v1400
        %1402 = vst [vmem:[%s272 + $0x1] sm:$0x1] %v1401
        %s1403 = sand.u32 %s103, 1
        %s1404 = scalar_lea.sflag [#allocation4], %s1403
        %s1405 = sand.u32 %s103, 1
        %s1406 = smul.addr %s1405, 64
        %s1407 = scalar_lea.vmem [#allocation3], %s1406
        %s1408 = sand.u32 %s27, 1
        %s1409 = scalar_lea.sflag [#allocation6], %s1408
        %s1410 = sand.u32 %s129, 1
        %s1411 = smul.addr %s1410, 2
        %s1412 = scalar_lea.vmem [#allocation5], %s1411
        %s1413 = sand.u32 %s27, 1
        %s1414 = scalar_lea.sflag [#allocation6], %s1413
        %s1415 = sand.u32 %s155, 1
        %s1416 = smul.addr %s1415, 64
        %s1417 = scalar_lea.vmem [#allocation7], %s1416
        %s1418 = sand.u32 %s181, 1
        %s1419 = scalar_lea.sflag [#allocation9], %s1418
        %s1420 = sand.u32 %s181, 1
        %s1421 = smul.addr %s1420, 2
        %s1422 = scalar_lea.vmem [#allocation8], %s1421
        // Predicated region
        $region33: #{tpu_custom_call.1} parent=31 // pred_check
          %p1423 = pneg %p113
        $region34: #{tpu_custom_call.1} parent=31 // pred_check_branch
          %1425 = sbr.rel (%p1423) target = $region36
        $region35: #{tpu_custom_call.1} parent=31 // pred_region
          %s1427 = ssub.s32 1024, 1024
          %1428 = vsyncadd %s1404, %s1427
          %s1429 = smul.addr %s27, 8
          %s1430 = smul.addr %s1429, 128
          %s1431 = scalar_lea.hbm %s3, %s1430
          %s1432 = sshll.u32 %s1407, 4
          %s1433 = int_to_ptr.vmem [resolvable:$true] %s1432
          %1438 = dma.vmem_to_hbm [thread:$0]  %s1433, 1024, %s1431, %s1404, 128, 128, 8
        $region36: #{tpu_custom_call.1} parent=31 // pred_fallthru
          _
        // Predicated region
        $region37: #{tpu_custom_call.1} parent=31 // pred_check
          %p1439 = pneg %p139
        $region38: #{tpu_custom_call.1} parent=31 // pred_check_branch
          %1441 = sbr.rel (%p1439) target = $region40
        $region39: #{tpu_custom_call.1} parent=31 // pred_region
          %s1443 = ssub.s32 32, 32
          %1444 = vsyncadd %s1409, %s1443
          %s1445 = smul.addr %s27, 32
          %s1446 = scalar_lea.hbm %s4, %s1445
          %s1448 = sshll.u32 %s1412, 4
          %s1449 = int_to_ptr.vmem [resolvable:$true] %s1448
          %1451 = dma.vmem_to_hbm [thread:$0]  %s1449, 32, %s1446, %s1409
        $region40: #{tpu_custom_call.1} parent=31 // pred_fallthru
          _
        // Predicated region
        $region41: #{tpu_custom_call.1} parent=31 // pred_check
          %p1452 = pneg %p165
        $region42: #{tpu_custom_call.1} parent=31 // pred_check_branch
          %1454 = sbr.rel (%p1452) target = $region44
        $region43: #{tpu_custom_call.1} parent=31 // pred_region
          %s1456 = ssub.s32 1024, 1024
          %1457 = vsyncadd %s1414, %s1456
          %s1458 = smul.addr %s27, 8
          %s1459 = smul.addr %s1458, 128
          %s1460 = scalar_lea.hbm %s5, %s1459
          %s1461 = sshll.u32 %s1417, 4
          %s1462 = int_to_ptr.vmem [resolvable:$true] %s1461
          %1467 = dma.vmem_to_hbm [thread:$0]  %s1462, 1024, %s1460, %s1414, 128, 128, 8
        $region44: #{tpu_custom_call.1} parent=31 // pred_fallthru
          _
        // Predicated region
        $region45: #{tpu_custom_call.1} parent=31 // pred_check
          %p1468 = pneg %p191
        $region46: #{tpu_custom_call.1} parent=31 // pred_check_branch
          %1470 = sbr.rel (%p1468) target = $region48
        $region47: #{tpu_custom_call.1} parent=31 // pred_region
          %s1472 = ssub.s32 32, 32
          %1473 = vsyncadd %s1419, %s1472
          %s1474 = smul.addr %s27, 32
          %s1475 = scalar_lea.hbm %s6, %s1474
          %s1477 = sshll.u32 %s1422, 4
          %s1478 = int_to_ptr.vmem [resolvable:$true] %s1477
          %1480 = dma.vmem_to_hbm [thread:$0]  %s1478, 32, %s1475, %s1419
        $region48: #{tpu_custom_call.1} parent=31 // pred_fallthru
          _
      $region32: #{tpu_custom_call.1} parent=5 // pred_fallthru
        _
      %p1481 = scmp.le.s32.totalorder 2, %s22
      // Predicated region
      $region49: #{tpu_custom_call.1} parent=5 // pred_check
        %p1482 = pneg %p1481
      $region50: #{tpu_custom_call.1} parent=5 // pred_check_branch
        %1484 = sbr.rel (%p1482) target = $region52
      $region51: #{tpu_custom_call.1} parent=5 // pred_region
        %s1485 = ssub.s32 %s22, 2
        // Predicated region
        $region53: #{tpu_custom_call.1} parent=51 // pred_check
          %p1486 = pneg %p119
        $region54: #{tpu_custom_call.1} parent=51 // pred_check_branch
          %1488 = sbr.rel (%p1486) target = $region56
        $region55: #{tpu_custom_call.1} parent=51 // pred_region
          %s1489 = sand.u32 %s104, 1
          %s1490 = scalar_lea.sflag [#allocation4], %s1489
          %s1491 = sand.u32 %s104, 1
          %s1492 = smul.addr %s1491, 64
          %s1493 = scalar_lea.vmem [#allocation3], %s1492
          %1494 = dma.done %s1490, 1024
        $region56: #{tpu_custom_call.1} parent=51 // pred_fallthru
          _
        // Predicated region
        $region57: #{tpu_custom_call.1} parent=51 // pred_check
          %p1495 = pneg %p145
        $region58: #{tpu_custom_call.1} parent=51 // pred_check_branch
          %1497 = sbr.rel (%p1495) target = $region60
        $region59: #{tpu_custom_call.1} parent=51 // pred_region
          %s1498 = sand.u32 %s28, 1
          %s1499 = scalar_lea.sflag [#allocation6], %s1498
          %s1500 = sand.u32 %s130, 1
          %s1501 = smul.addr %s1500, 2
          %s1502 = scalar_lea.vmem [#allocation5], %s1501
          %1503 = dma.done %s1499, 32
        $region60: #{tpu_custom_call.1} parent=51 // pred_fallthru
          _
        // Predicated region
        $region61: #{tpu_custom_call.1} parent=51 // pred_check
          %p1504 = pneg %p171
        $region62: #{tpu_custom_call.1} parent=51 // pred_check_branch
          %1506 = sbr.rel (%p1504) target = $region64
        $region63: #{tpu_custom_call.1} parent=51 // pred_region
          %s1507 = sand.u32 %s28, 1
          %s1508 = scalar_lea.sflag [#allocation6], %s1507
          %s1509 = sand.u32 %s156, 1
          %s1510 = smul.addr %s1509, 64
          %s1511 = scalar_lea.vmem [#allocation7], %s1510
          %1512 = dma.done %s1508, 1024
        $region64: #{tpu_custom_call.1} parent=51 // pred_fallthru
          _
        // Predicated region
        $region65: #{tpu_custom_call.1} parent=51 // pred_check
          %p1513 = pneg %p197
        $region66: #{tpu_custom_call.1} parent=51 // pred_check_branch
          %1515 = sbr.rel (%p1513) target = $region68
        $region67: #{tpu_custom_call.1} parent=51 // pred_region
          %s1516 = sand.u32 %s182, 1
          %s1517 = scalar_lea.sflag [#allocation9], %s1516
          %s1518 = sand.u32 %s182, 1
          %s1519 = smul.addr %s1518, 2
          %s1520 = scalar_lea.vmem [#allocation8], %s1519
          %1521 = dma.done %s1517, 32
        $region68: #{tpu_custom_call.1} parent=51 // pred_fallthru
          _
      $region52: #{tpu_custom_call.1} parent=5 // pred_fallthru
        _
    $region6: #{tpu_custom_call.1} parent=1 // loop_footer
      %s26 = sadd.s32 1, %s22
    $region7: #{tpu_custom_call.1} parent=1 // loop_footer_branch
      %21 = sbr.rel target = $region3
    $region8: #{tpu_custom_call.1} parent=1 // loop_exit
      _
    %1522 = vsyncpa [#allocation4], 1
    %s1523 = scalar_lea.sflag [#allocation4], 1
    %1524 = vsyncpa %s1523, 1
    %1525 = vsyncpa [#allocation6], 1
    %s1526 = scalar_lea.sflag [#allocation6], 1
    %1527 = vsyncpa %s1526, 1
    %1528 = vsyncpa [#allocation9], 1
    %s1529 = scalar_lea.sflag [#allocation9], 1
    %1530 = vsyncpa %s1529, 1

</llo_original>
